<compile_context>
chip_gen: v5e
topology: v5e:2x2
jax: 0.10.0
libtpu: 0.0.40
codegen_flags: <defaults>
</compile_context>

<pallas_src>
import numpy as np
import jax
import jax.numpy as jnp
from jax.experimental import pallas as pl
from jax.experimental.pallas import tpu as pltpu


# ----------------------------- static helpers --------------------------------
def _resize_matrix(n_in, n_out):
    """(n_out, n_in) bilinear x-resize matrix, align_corners=True (static numpy)."""
    R = np.zeros((n_out, n_in), np.float32)
    for o in range(n_out):
        src = 0.0 if n_out == 1 else o * (n_in - 1) / (n_out - 1)
        i0 = min(int(np.floor(src)), n_in - 1)
        i1 = min(i0 + 1, n_in - 1)
        f = float(src - i0)
        R[o, i0] += 1.0 - f
        R[o, i1] += f
    return R


def _band_matrices(w_hwio, wout):
    """Banded conv weights.

    w_hwio: (3, 3, Ci, Co).  Returns (3, wout*Ci, wout*Co) where
    band[ky][(w+kx-1)*Ci + ci, w*Co + co] = w[ky, kx, ci, co]  (taps falling
    outside [0, wout) are dropped, i.e. zero padding is baked in).
    """
    ci, co = int(w_hwio.shape[2]), int(w_hwio.shape[3])
    idx = np.arange(wout)
    bands = []
    for ky in range(3):
        bk = jnp.zeros((wout * ci, wout * co), jnp.float32)
        for kx in range(3):
            src = idx + kx - 1
            valid = (src >= 0) & (src < wout)
            P = np.zeros((wout, wout), np.float32)
            P[src[valid], idx[valid]] = 1.0              # P[w+kx-1, w] = 1
            bk = bk + jnp.kron(jnp.asarray(P), w_hwio[ky, kx].astype(jnp.float32))
        bands.append(bk)
    return jnp.stack(bands)                              # (3, wout*Ci, wout*Co)


# --------------------------------- kernel ------------------------------------
def _make_upconv_kernel(H2):
    def conv_rows(inp, m_ref, b_ref):
        # inp: (H2, K) image rows with (width, channel) flattened on lanes.
        # m_ref: (3, K, N) banded weights, one band per vertical tap ky.
        #   y[h] = inp[h-1] @ m[0] + inp[h] @ m[1] + inp[h+1] @ m[2]   (zero-pad rows)
        # The halo is applied by shifting the narrow (N-lane) matmul OUTPUTS by one
        # row, which is much cheaper than building a (H2, 3K) lane-concatenated input.
        n = m_ref.shape[2]
        t0 = jnp.dot(inp, m_ref[0], preferred_element_type=jnp.float32)
        t1 = jnp.dot(inp, m_ref[1], preferred_element_type=jnp.float32)
        t2 = jnp.dot(inp, m_ref[2], preferred_element_type=jnp.float32)
        zrow = jnp.zeros((1, n), jnp.float32)
        y = (t1
             + jnp.concatenate([zrow, t0[:H2 - 1, :]], axis=0)   # row h <- t0[h-1]
             + jnp.concatenate([t2[1:, :], zrow], axis=0))       # row h <- t2[h+1]
        return jnp.maximum(y + b_ref[...], 0.0)                  # (H2, N)

    def kernel(x_ref, rh_ref, m1_ref, b1_ref, m2_ref, b2_ref, o_ref):
        x = x_ref[...].astype(jnp.float32)                       # (H, W*Cin)
        # height upsample as one MXU matmul
        xh = jnp.dot(rh_ref[...], x, preferred_element_type=jnp.float32)  # (H2, W*Cin)
        # conv1 (width upsample folded into its banded weights) + relu
        y1 = conv_rows(xh, m1_ref, b1_ref)                       # (H2, W2*Cout)
        # conv2 + relu
        y2 = conv_rows(y1, m2_ref, b2_ref)                       # (H2, W2*Cout)
        o_ref[...] = y2.astype(o_ref.dtype)

    return kernel


# -------------------------------- wrapper -------------------------------------
def upconv_forward(x_nchw, w1, b1, w2, b2):
    """UpConv ('bilinear') forward.

    x_nchw: (B, Cin, H, W); w1: (3,3,Cin,Cout) HWIO; w2: (3,3,Cout,Cout) HWIO.
    Returns (B, Cout, 2H, 2W).  (PyTorch OIHW weights -> HWIO via transpose(2,3,1,0).)
    """
    B, Cin, H, W = x_nchw.shape
    Cout = int(w1.shape[-1])
    H2, W2 = 2 * H, 2 * W

    # NCHW -> NHWC -> lane-dense (B, H, W*Cin) slab.
    x = jnp.transpose(x_nchw, (0, 2, 3, 1)).reshape(B, H, W * Cin).astype(jnp.float32)

    # Static interpolation matrices (align_corners=True, scale 2).
    Rh = jnp.asarray(_resize_matrix(H, H2))                              # (H2, H)
    Rw = _resize_matrix(W, W2)                                           # (W2, W)
    S = jnp.asarray(np.kron(Rw.T, np.eye(Cin, dtype=np.float32)))        # (W*Cin, W2*Cin)

    # Banded conv weights (zero padding + width taps baked in).
    band1 = _band_matrices(w1, W2)                                       # (3, W2*Cin,  W2*Cout)
    band2 = _band_matrices(w2, W2)                                       # (3, W2*Cout, W2*Cout)
    # Fold the width upsample into conv1's bands: (3, W*Cin, W2*Cout).
    m1 = jnp.einsum("pq,kqr->kpr", S, band1,
                    precision=jax.lax.Precision.HIGHEST)
    m2 = band2                                                           # (3, W2*Cout, W2*Cout)

    b1row = jnp.tile(b1.astype(jnp.float32), W2).reshape(1, W2 * Cout)
    b2row = jnp.tile(b2.astype(jnp.float32), W2).reshape(1, W2 * Cout)

    kernel = _make_upconv_kernel(H2)
    out = pl.pallas_call(
        kernel,
        out_shape=jax.ShapeDtypeStruct((B, H2, W2 * Cout), jnp.float32),
        grid_spec=pltpu.PrefetchScalarGridSpec(
            num_scalar_prefetch=0,
            grid=(B,),                                         # one batch element per step
            in_specs=[
                pl.BlockSpec((None, H, W * Cin), lambda b: (b, 0, 0)),
                pl.BlockSpec((H2, H), lambda b: (0, 0)),
                pl.BlockSpec((3, W * Cin, W2 * Cout), lambda b: (0, 0, 0)),
                pl.BlockSpec((1, W2 * Cout), lambda b: (0, 0)),
                pl.BlockSpec((3, W2 * Cout, W2 * Cout), lambda b: (0, 0, 0)),
                pl.BlockSpec((1, W2 * Cout), lambda b: (0, 0)),
            ],
            out_specs=pl.BlockSpec((None, H2, W2 * Cout), lambda b: (b, 0, 0)),
        ),
        compiler_params=pltpu.CompilerParams(
            dimension_semantics=("parallel",)),
    )(x, Rh, m1, b1row, m2, b2row)

    # (B, H2, W2*Cout) -> NCHW
    return jnp.transpose(out.reshape(B, H2, W2, Cout), (0, 3, 1, 2))


# ------------------- independent pure-JAX reference (check) -------------------
def upconv_reference(x_nchw, w1, b1, w2, b2):
    x = x_nchw.astype(jnp.float32)
    B, C, H, W = x.shape
    H2, W2 = 2 * H, 2 * W

    def taps(n_in, n_out):
        o = jnp.arange(n_out, dtype=jnp.float32)
        src = o * (n_in - 1) / max(n_out - 1, 1)
        i0 = jnp.clip(jnp.floor(src).astype(jnp.int32), 0, n_in - 1)
        i1 = jnp.minimum(i0 + 1, n_in - 1)
        f = src - i0.astype(jnp.float32)
        return i0, i1, f

    hi0, hi1, hf = taps(H, H2)
    wi0, wi1, wf = taps(W, W2)
    xh = (1.0 - hf)[None, None, :, None] * x[:, :, hi0, :] \
        + hf[None, None, :, None] * x[:, :, hi1, :]
    xu = (1.0 - wf)[None, None, None, :] * xh[:, :, :, wi0] \
        + wf[None, None, None, :] * xh[:, :, :, wi1]

    def conv3x3_relu(z, w_hwio, b):
        y = jax.lax.conv_general_dilated(
            z, w_hwio.astype(jnp.float32), window_strides=(1, 1), padding="SAME",
            dimension_numbers=("NCHW", "HWIO", "NCHW"),
            precision=jax.lax.Precision.HIGHEST)
        return jnp.maximum(y + b.reshape(1, -1, 1, 1), 0.0)

    return conv3x3_relu(conv3x3_relu(xu, w1, b1), w2, b2)


if __name__ == "__main__":
    key = jax.random.PRNGKey(0)
    k1, k2, k3, k4, k5 = jax.random.split(key, 5)
    B, Cin, Cout, H, W = 2, 4, 8, 16, 16                 # x: (2, 4, 16, 16) NCHW

    x = jax.random.normal(k1, (B, Cin, H, W), jnp.float32)
    w1 = 0.1 * jax.random.normal(k2, (3, 3, Cin, Cout), jnp.float32)    # HWIO
    b1 = 0.1 * jax.random.normal(k3, (Cout,), jnp.float32)
    w2 = 0.1 * jax.random.normal(k4, (3, 3, Cout, Cout), jnp.float32)   # HWIO
    b2 = 0.1 * jax.random.normal(k5, (Cout,), jnp.float32)

    out = jax.block_until_ready(upconv_forward(x, w1, b1, w2, b2))
    ref = jax.block_until_ready(upconv_reference(x, w1, b1, w2, b2))

    assert out.shape == (B, Cout, 2 * H, 2 * W), out.shape
    np.testing.assert_allclose(np.asarray(out), np.asarray(ref), rtol=2e-2, atol=2e-2)
    print("KERNEL_OK")
</pallas_src>

<mosaic_0001>
module attributes {stable_mosaic.version = 11 : i64} {
  func.func @kernel(%arg0: i32, %arg1: memref<1x16x64xf32, #tpu.memory_space<vmem>>, %arg2: memref<32x16xf32, #tpu.memory_space<vmem>>, %arg3: memref<3x64x256xf32, #tpu.memory_space<vmem>>, %arg4: memref<1x256xf32, #tpu.memory_space<vmem>>, %arg5: memref<3x256x256xf32, #tpu.memory_space<vmem>>, %arg6: memref<1x256xf32, #tpu.memory_space<vmem>>, %arg7: memref<1x32x256xf32, #tpu.memory_space<vmem>>) attributes {dimension_semantics = [#tpu.dimension_semantics<parallel>], iteration_bounds = array<i64: 2>, scalar_prefetch = 0 : i64, scratch_operands = 0 : i64, tpu.core_type = #tpu.core_type<tc>, window_params = [{transform_indices = @transform_0, window_bounds = array<i64: 1, 16, 64>}, {pipeline_mode = #tpu.pipeline_mode<synchronous>, transform_indices = @transform_1, window_bounds = array<i64: 32, 16>}, {pipeline_mode = #tpu.pipeline_mode<synchronous>, transform_indices = @transform_2, window_bounds = array<i64: 3, 64, 256>}, {pipeline_mode = #tpu.pipeline_mode<synchronous>, transform_indices = @transform_3, window_bounds = array<i64: 1, 256>}, {pipeline_mode = #tpu.pipeline_mode<synchronous>, transform_indices = @transform_4, window_bounds = array<i64: 3, 256, 256>}, {pipeline_mode = #tpu.pipeline_mode<synchronous>, transform_indices = @transform_5, window_bounds = array<i64: 1, 256>}, {transform_indices = @transform_6, window_bounds = array<i64: 1, 32, 256>}]} {
    %c0 = arith.constant 0 : index
    %c0_0 = arith.constant 0 : index
    %c0_1 = arith.constant 0 : index
    %0 = vector.load %arg1[%c0, %c0_0, %c0_1] : memref<1x16x64xf32, #tpu.memory_space<vmem>>, vector<1x16x64xf32>
    %1 = vector.shape_cast %0 : vector<1x16x64xf32> to vector<16x64xf32>
    %c0_2 = arith.constant 0 : index
    %c0_3 = arith.constant 0 : index
    %2 = vector.load %arg2[%c0_2, %c0_3] : memref<32x16xf32, #tpu.memory_space<vmem>>, vector<32x16xf32>
    %cst = arith.constant dense<0.000000e+00> : vector<32x64xf32>
    %3 = tpu.matmul %2, %1, %cst {dimension_numbers = #tpu.dot_dimension_numbers<[1], [0], [0], [1], [0, 0, 1, 1], [], []>} : vector<32x16xf32>, vector<16x64xf32>, vector<32x64xf32> -> vector<32x64xf32>
    %c0_4 = arith.constant 0 : index
    %c0_5 = arith.constant 0 : index
    %c0_6 = arith.constant 0 : index
    %4 = vector.load %arg3[%c0_4, %c0_5, %c0_6] : memref<3x64x256xf32, #tpu.memory_space<vmem>>, vector<1x64x256xf32>
    %5 = vector.shape_cast %4 : vector<1x64x256xf32> to vector<64x256xf32>
    %cst_7 = arith.constant dense<0.000000e+00> : vector<32x256xf32>
    %6 = tpu.matmul %3, %5, %cst_7 {dimension_numbers = #tpu.dot_dimension_numbers<[1], [0], [0], [1], [0, 0, 1, 1], [], []>} : vector<32x64xf32>, vector<64x256xf32>, vector<32x256xf32> -> vector<32x256xf32>
    %c1 = arith.constant 1 : index
    %c0_8 = arith.constant 0 : index
    %c0_9 = arith.constant 0 : index
    %7 = vector.load %arg3[%c1, %c0_8, %c0_9] : memref<3x64x256xf32, #tpu.memory_space<vmem>>, vector<1x64x256xf32>
    %8 = vector.shape_cast %7 : vector<1x64x256xf32> to vector<64x256xf32>
    %cst_10 = arith.constant dense<0.000000e+00> : vector<32x256xf32>
    %9 = tpu.matmul %3, %8, %cst_10 {dimension_numbers = #tpu.dot_dimension_numbers<[1], [0], [0], [1], [0, 0, 1, 1], [], []>} : vector<32x64xf32>, vector<64x256xf32>, vector<32x256xf32> -> vector<32x256xf32>
    %c2 = arith.constant 2 : index
    %c0_11 = arith.constant 0 : index
    %c0_12 = arith.constant 0 : index
    %10 = vector.load %arg3[%c2, %c0_11, %c0_12] : memref<3x64x256xf32, #tpu.memory_space<vmem>>, vector<1x64x256xf32>
    %11 = vector.shape_cast %10 : vector<1x64x256xf32> to vector<64x256xf32>
    %cst_13 = arith.constant dense<0.000000e+00> : vector<32x256xf32>
    %12 = tpu.matmul %3, %11, %cst_13 {dimension_numbers = #tpu.dot_dimension_numbers<[1], [0], [0], [1], [0, 0, 1, 1], [], []>} : vector<32x64xf32>, vector<64x256xf32>, vector<32x256xf32> -> vector<32x256xf32>
    %cst_14 = arith.constant 0.000000e+00 : f32
    %13 = vector.broadcast %cst_14 : f32 to vector<1x256xf32>
    %14 = vector.extract_strided_slice %6 {offsets = [0, 0], sizes = [31, 256], strides = [1, 1]} : vector<32x256xf32> to vector<31x256xf32>
    %15 = tpu.concatenate %13, %14 in 0 : vector<1x256xf32>, vector<31x256xf32> -> vector<32x256xf32>
    %16 = arith.addf %9, %15 : vector<32x256xf32>
    %17 = vector.extract_strided_slice %12 {offsets = [1, 0], sizes = [31, 256], strides = [1, 1]} : vector<32x256xf32> to vector<31x256xf32>
    %18 = tpu.concatenate %17, %13 in 0 : vector<31x256xf32>, vector<1x256xf32> -> vector<32x256xf32>
    %19 = arith.addf %16, %18 : vector<32x256xf32>
    %c0_15 = arith.constant 0 : index
    %c0_16 = arith.constant 0 : index
    %20 = vector.load %arg4[%c0_15, %c0_16] : memref<1x256xf32, #tpu.memory_space<vmem>>, vector<1x256xf32>
    %21 = vector.broadcast %20 : vector<1x256xf32> to vector<32x256xf32>
    %22 = arith.addf %19, %21 : vector<32x256xf32>
    %cst_17 = arith.constant 0.000000e+00 : f32
    %23 = vector.broadcast %cst_17 : f32 to vector<32x256xf32>
    %24 = arith.maximumf %22, %23 : vector<32x256xf32>
    %c0_18 = arith.constant 0 : index
    %c0_19 = arith.constant 0 : index
    %c0_20 = arith.constant 0 : index
    %25 = vector.load %arg5[%c0_18, %c0_19, %c0_20] : memref<3x256x256xf32, #tpu.memory_space<vmem>>, vector<1x256x256xf32>
    %26 = vector.shape_cast %25 : vector<1x256x256xf32> to vector<256x256xf32>
    %cst_21 = arith.constant dense<0.000000e+00> : vector<32x256xf32>
    %27 = tpu.matmul %24, %26, %cst_21 {dimension_numbers = #tpu.dot_dimension_numbers<[1], [0], [0], [1], [0, 0, 1, 1], [], []>} : vector<32x256xf32>, vector<256x256xf32>, vector<32x256xf32> -> vector<32x256xf32>
    %c1_22 = arith.constant 1 : index
    %c0_23 = arith.constant 0 : index
    %c0_24 = arith.constant 0 : index
    %28 = vector.load %arg5[%c1_22, %c0_23, %c0_24] : memref<3x256x256xf32, #tpu.memory_space<vmem>>, vector<1x256x256xf32>
    %29 = vector.shape_cast %28 : vector<1x256x256xf32> to vector<256x256xf32>
    %cst_25 = arith.constant dense<0.000000e+00> : vector<32x256xf32>
    %30 = tpu.matmul %24, %29, %cst_25 {dimension_numbers = #tpu.dot_dimension_numbers<[1], [0], [0], [1], [0, 0, 1, 1], [], []>} : vector<32x256xf32>, vector<256x256xf32>, vector<32x256xf32> -> vector<32x256xf32>
    %c2_26 = arith.constant 2 : index
    %c0_27 = arith.constant 0 : index
    %c0_28 = arith.constant 0 : index
    %31 = vector.load %arg5[%c2_26, %c0_27, %c0_28] : memref<3x256x256xf32, #tpu.memory_space<vmem>>, vector<1x256x256xf32>
    %32 = vector.shape_cast %31 : vector<1x256x256xf32> to vector<256x256xf32>
    %cst_29 = arith.constant dense<0.000000e+00> : vector<32x256xf32>
    %33 = tpu.matmul %24, %32, %cst_29 {dimension_numbers = #tpu.dot_dimension_numbers<[1], [0], [0], [1], [0, 0, 1, 1], [], []>} : vector<32x256xf32>, vector<256x256xf32>, vector<32x256xf32> -> vector<32x256xf32>
    %cst_30 = arith.constant 0.000000e+00 : f32
    %34 = vector.broadcast %cst_30 : f32 to vector<1x256xf32>
    %35 = vector.extract_strided_slice %27 {offsets = [0, 0], sizes = [31, 256], strides = [1, 1]} : vector<32x256xf32> to vector<31x256xf32>
    %36 = tpu.concatenate %34, %35 in 0 : vector<1x256xf32>, vector<31x256xf32> -> vector<32x256xf32>
    %37 = arith.addf %30, %36 : vector<32x256xf32>
    %38 = vector.extract_strided_slice %33 {offsets = [1, 0], sizes = [31, 256], strides = [1, 1]} : vector<32x256xf32> to vector<31x256xf32>
    %39 = tpu.concatenate %38, %34 in 0 : vector<31x256xf32>, vector<1x256xf32> -> vector<32x256xf32>
    %40 = arith.addf %37, %39 : vector<32x256xf32>
    %c0_31 = arith.constant 0 : index
    %c0_32 = arith.constant 0 : index
    %41 = vector.load %arg6[%c0_31, %c0_32] : memref<1x256xf32, #tpu.memory_space<vmem>>, vector<1x256xf32>
    %42 = vector.broadcast %41 : vector<1x256xf32> to vector<32x256xf32>
    %43 = arith.addf %40, %42 : vector<32x256xf32>
    %cst_33 = arith.constant 0.000000e+00 : f32
    %44 = vector.broadcast %cst_33 : f32 to vector<32x256xf32>
    %45 = arith.maximumf %43, %44 : vector<32x256xf32>
    %c0_34 = arith.constant 0 : index
    %c0_35 = arith.constant 0 : index
    %c0_36 = arith.constant 0 : index
    %46 = vector.load %arg7[%c0_34, %c0_35, %c0_36] : memref<1x32x256xf32, #tpu.memory_space<vmem>>, vector<1x32x256xf32>
    %47 = vector.shape_cast %46 : vector<1x32x256xf32> to vector<32x256xf32>
    %48 = vector.shape_cast %45 : vector<32x256xf32> to vector<1x32x256xf32>
    tpu.vector_store %arg7[%c0_34, %c0_35, %c0_36], %48 {strides = array<i32>} : memref<1x32x256xf32, #tpu.memory_space<vmem>>, vector<1x32x256xf32>,
    return
  }
  func.func @transform_0(%arg0: i32) -> (i32, i32, i32) {
    %c0_i32 = arith.constant 0 : i32
    %c0_i32_0 = arith.constant 0 : i32
    %c0_i32_1 = arith.constant 0 : i32
    return %arg0, %c0_i32, %c0_i32_0 : i32, i32, i32
  }
  func.func @transform_1(%arg0: i32) -> (i32, i32) {
    %c0_i32 = arith.constant 0 : i32
    %c0_i32_0 = arith.constant 0 : i32
    %c0_i32_1 = arith.constant 0 : i32
    return %c0_i32, %c0_i32_0 : i32, i32
  }
  func.func @transform_2(%arg0: i32) -> (i32, i32, i32) {
    %c0_i32 = arith.constant 0 : i32
    %c0_i32_0 = arith.constant 0 : i32
    %c0_i32_1 = arith.constant 0 : i32
    %c0_i32_2 = arith.constant 0 : i32
    return %c0_i32, %c0_i32_0, %c0_i32_1 : i32, i32, i32
  }
  func.func @transform_3(%arg0: i32) -> (i32, i32) {
    %c0_i32 = arith.constant 0 : i32
    %c0_i32_0 = arith.constant 0 : i32
    %c0_i32_1 = arith.constant 0 : i32
    return %c0_i32, %c0_i32_0 : i32, i32
  }
  func.func @transform_4(%arg0: i32) -> (i32, i32, i32) {
    %c0_i32 = arith.constant 0 : i32
    %c0_i32_0 = arith.constant 0 : i32
    %c0_i32_1 = arith.constant 0 : i32
    %c0_i32_2 = arith.constant 0 : i32
    return %c0_i32, %c0_i32_0, %c0_i32_1 : i32, i32, i32
  }
  func.func @transform_5(%arg0: i32) -> (i32, i32) {
    %c0_i32 = arith.constant 0 : i32
    %c0_i32_0 = arith.constant 0 : i32
    %c0_i32_1 = arith.constant 0 : i32
    return %c0_i32, %c0_i32_0 : i32, i32
  }
  func.func @transform_6(%arg0: i32) -> (i32, i32, i32) {
    %c0_i32 = arith.constant 0 : i32
    %c0_i32_0 = arith.constant 0 : i32
    %c0_i32_1 = arith.constant 0 : i32
    return %arg0, %c0_i32, %c0_i32_0 : i32, i32, i32
  }
}

</mosaic_0001>

<llo_original>
// kernel: tpu_custom_call.1
$region0: #{tpu_custom_call.1}
  #allocation0 [shape = 'u32[]', space=smem, size = 0x4, offset = 0x4, fixed_abs, tag = 'smem constant byte address 0x4 - core index']
  #allocation1 [shape = 'u32[72,128]{1,0:T(1,128)}', space=vmem, size = 0x9000, scoped, tag = 'internal scratch']
  %s0 = inlined_call_operand.vmem [shape: f32[2,16,64], index: 0, kind: input, shape index: {}]
  %s1 = inlined_call_operand.vmem [shape: f32[32,16], index: 1, kind: input, shape index: {}]
  %s2 = inlined_call_operand.hbm [shape: f32[3,64,256], index: 2, kind: input, shape index: {}]
  %s3 = inlined_call_operand.vmem [shape: f32[1,256], index: 3, kind: input, shape index: {}]
  %s4 = inlined_call_operand.hbm [shape: f32[3,256,256], index: 4, kind: input, shape index: {}]
  %s5 = inlined_call_operand.vmem [shape: f32[1,256], index: 5, kind: input, shape index: {}]
  %s6 = inlined_call_operand.hbm [shape: f32[2,32,256], index: 6, kind: output, shape index: {}]
  %s7 = sld [smem:[#allocation0]]
  $region65: #{tpu_custom_call.1} parent=0
    _
  %s9 = ssub.s32 1, %s7
  %s10 = scalar_select 0, %s9, %s7
  $region1: #{tpu_custom_call.1} parent=0
    #allocation2 [shape = 'u8[196608]{0}', space=vmem, size = 0x30000, scoped, tag = 'input window, operand 2, single buffered']
    #allocation3 [shape = 's32[2]{0}', space=sflag, size = 0x8, scoped, tag = 'scoped memory for tpu_custom_call.1']
    #allocation4 [shape = 's32[2]{0}', space=sflag, size = 0x8, scoped, tag = 'scoped memory for tpu_custom_call.1']
    #allocation5 [shape = 'u8[786432]{0}', space=vmem, size = 0xc0000, scoped, tag = 'input window, operand 4, single buffered']
    #allocation6 [shape = 's32[1]{0}', space=sflag, size = 0x4, scoped, tag = 'scoped memory for tpu_custom_call.1']
    #allocation7 [shape = 'u8[65536]{0}', space=vmem, size = 0x10000, scoped, tag = 'output window, operand 0']
    %11 = vsyncpa [#allocation3], 0
    %12 = vsyncpa [#allocation6], 0
    %13 = vsyncpa [#allocation4], 0
    %s14 = scalar_lea.sflag [#allocation4], 1
    %15 = vsyncpa %s14, 0
    loop: start=0, step=1, limit=4
    $region2: #{tpu_custom_call.1} parent=1 // loop_pre_header
      _
    $region3: #{tpu_custom_call.1} parent=1 // loop_header
      %s17 = sphi 0, %s21
      %p18 = scmp.ge.s32.totalorder %s17, 4
      %s27 = sphi 0, %s29
      %s30 = sphi 0, %s27
      %s31 = sphi 0, %s30
      %s47 = sphi 0, %s31
      %s51 = sphi 0, %s51
      %s53 = sphi 0, %s51
      %s54 = sphi 0, %s53
      %s68 = sphi 0, %s54
      %s72 = sphi 0, %s72
      %s74 = sphi 0, %s72
      %s75 = sphi 0, %s74
      %s89 = sphi 0, %s75
      %s93 = sphi 0, %s93
      %s95 = sphi 0, %s93
      %s96 = sphi 0, %s95
      %s110 = sphi 0, %s96
      %s114 = sphi 0, %s114
      %s116 = sphi 0, %s114
      %s117 = sphi 0, %s116
      %s131 = sphi 0, %s117
      %s135 = sphi 0, %s135
      %s137 = sphi 0, %s135
      %s138 = sphi 0, %s137
      %s152 = sphi 0, %s138
      %s158 = sphi 0, %s160
      %s161 = sphi 0, %s158
      %s162 = sphi 0, %s161
      %s178 = sphi 0, %s162
    $region4: #{tpu_custom_call.1} parent=1 // loop_header_branch
      %20 = sbr.rel (%p18) target = $region8
    $region5: #{tpu_custom_call.1} parent=1 // loop_body
      %s22 = ssub.s32 %s17, 1
      %s23 = ssub.s32 %s17, 2
      %s24 = sadd.s32 %s17, 1
      %s25 = ssub.s32 %s17, %s24
      %p26 = scmp.eq.s32.totalorder %s25, 0
      %s28 = sadd.s32 %s27, 1
      %s29 = scalar_select %p26, %s27, %s28
      %p32 = pneg %p26
      %p33 = scmp.eq.s32.totalorder %s17, 1
      %p34 = por %p32, %p33
      %p35 = scmp.ne.s32.totalorder %s27, %s30
      %p36 = scmp.eq.s32.totalorder %s17, 0
      %p37 = por %p35, %p36
      %p38 = scmp.ne.s32.totalorder %s27, %s30
      %p39 = scmp.eq.s32.totalorder %s22, 1
      %p40 = por %p38, %p39
      %p41 = scmp.ne.s32.totalorder %s30, %s31
      %p42 = scmp.eq.s32.totalorder %s22, 0
      %p43 = por %p41, %p42
      %p44 = scmp.ne.s32.totalorder %s30, %s31
      %p45 = scmp.eq.s32.totalorder %s23, 1
      %p46 = por %p44, %p45
      %p48 = scmp.ne.s32.totalorder %s31, %s47
      %p49 = scmp.eq.s32.totalorder %s23, 0
      %p50 = por %p48, %p49
      %s52 = sadd.s32 %s51, 1
      %p55 = scmp.eq.s32.totalorder %s17, 1
      %p56 = scmp.ne.s32.totalorder %s51, %s53
      %p57 = scmp.eq.s32.totalorder %s17, 0
      %p58 = por %p56, %p57
      %p59 = scmp.ne.s32.totalorder %s51, %s53
      %p60 = scmp.eq.s32.totalorder %s22, 1
      %p61 = por %p59, %p60
      %p62 = scmp.ne.s32.totalorder %s53, %s54
      %p63 = scmp.eq.s32.totalorder %s22, 0
      %p64 = por %p62, %p63
      %p65 = scmp.ne.s32.totalorder %s53, %s54
      %p66 = scmp.eq.s32.totalorder %s23, 1
      %p67 = por %p65, %p66
      %p69 = scmp.ne.s32.totalorder %s54, %s68
      %p70 = scmp.eq.s32.totalorder %s23, 0
      %p71 = por %p69, %p70
      %s73 = sadd.s32 %s72, 1
      %p76 = scmp.eq.s32.totalorder %s17, 1
      %p77 = scmp.ne.s32.totalorder %s72, %s74
      %p78 = scmp.eq.s32.totalorder %s17, 0
      %p79 = por %p77, %p78
      %p80 = scmp.ne.s32.totalorder %s72, %s74
      %p81 = scmp.eq.s32.totalorder %s22, 1
      %p82 = por %p80, %p81
      %p83 = scmp.ne.s32.totalorder %s74, %s75
      %p84 = scmp.eq.s32.totalorder %s22, 0
      %p85 = por %p83, %p84
      %p86 = scmp.ne.s32.totalorder %s74, %s75
      %p87 = scmp.eq.s32.totalorder %s23, 1
      %p88 = por %p86, %p87
      %p90 = scmp.ne.s32.totalorder %s75, %s89
      %p91 = scmp.eq.s32.totalorder %s23, 0
      %p92 = por %p90, %p91
      %s94 = sadd.s32 %s93, 1
      %p97 = scmp.eq.s32.totalorder %s17, 1
      %p98 = scmp.ne.s32.totalorder %s93, %s95
      %p99 = scmp.eq.s32.totalorder %s17, 0
      %p100 = por %p98, %p99
      %p101 = scmp.ne.s32.totalorder %s93, %s95
      %p102 = scmp.eq.s32.totalorder %s22, 1
      %p103 = por %p101, %p102
      %p104 = scmp.ne.s32.totalorder %s95, %s96
      %p105 = scmp.eq.s32.totalorder %s22, 0
      %p106 = por %p104, %p105
      %p107 = scmp.ne.s32.totalorder %s95, %s96
      %p108 = scmp.eq.s32.totalorder %s23, 1
      %p109 = por %p107, %p108
      %p111 = scmp.ne.s32.totalorder %s96, %s110
      %p112 = scmp.eq.s32.totalorder %s23, 0
      %p113 = por %p111, %p112
      %s115 = sadd.s32 %s114, 1
      %p118 = scmp.eq.s32.totalorder %s17, 1
      %p119 = scmp.ne.s32.totalorder %s114, %s116
      %p120 = scmp.eq.s32.totalorder %s17, 0
      %p121 = por %p119, %p120
      %p122 = scmp.ne.s32.totalorder %s114, %s116
      %p123 = scmp.eq.s32.totalorder %s22, 1
      %p124 = por %p122, %p123
      %p125 = scmp.ne.s32.totalorder %s116, %s117
      %p126 = scmp.eq.s32.totalorder %s22, 0
      %p127 = por %p125, %p126
      %p128 = scmp.ne.s32.totalorder %s116, %s117
      %p129 = scmp.eq.s32.totalorder %s23, 1
      %p130 = por %p128, %p129
      %p132 = scmp.ne.s32.totalorder %s117, %s131
      %p133 = scmp.eq.s32.totalorder %s23, 0
      %p134 = por %p132, %p133
      %s136 = sadd.s32 %s135, 1
      %p139 = scmp.eq.s32.totalorder %s17, 1
      %p140 = scmp.ne.s32.totalorder %s135, %s137
      %p141 = scmp.eq.s32.totalorder %s17, 0
      %p142 = por %p140, %p141
      %p143 = scmp.ne.s32.totalorder %s135, %s137
      %p144 = scmp.eq.s32.totalorder %s22, 1
      %p145 = por %p143, %p144
      %p146 = scmp.ne.s32.totalorder %s137, %s138
      %p147 = scmp.eq.s32.totalorder %s22, 0
      %p148 = por %p146, %p147
      %p149 = scmp.ne.s32.totalorder %s137, %s138
      %p150 = scmp.eq.s32.totalorder %s23, 1
      %p151 = por %p149, %p150
      %p153 = scmp.ne.s32.totalorder %s138, %s152
      %p154 = scmp.eq.s32.totalorder %s23, 0
      %p155 = por %p153, %p154
      %s156 = ssub.s32 %s17, %s24
      %p157 = scmp.eq.s32.totalorder %s156, 0
      %s159 = sadd.s32 %s158, 1
      %s160 = scalar_select %p157, %s158, %s159
      %p163 = pneg %p157
      %p164 = scmp.eq.s32.totalorder %s17, 1
      %p165 = por %p163, %p164
      %p166 = scmp.ne.s32.totalorder %s158, %s161
      %p167 = scmp.eq.s32.totalorder %s17, 0
      %p168 = por %p166, %p167
      %p169 = scmp.ne.s32.totalorder %s158, %s161
      %p170 = scmp.eq.s32.totalorder %s22, 1
      %p171 = por %p169, %p170
      %p172 = scmp.ne.s32.totalorder %s161, %s162
      %p173 = scmp.eq.s32.totalorder %s22, 0
      %p174 = por %p172, %p173
      %p175 = scmp.ne.s32.totalorder %s161, %s162
      %p176 = scmp.eq.s32.totalorder %s23, 1
      %p177 = por %p175, %p176
      %p179 = scmp.ne.s32.totalorder %s162, %s178
      %p180 = scmp.eq.s32.totalorder %s23, 0
      %p181 = por %p179, %p180
      %p182 = scmp.le.s32.totalorder 1, %s17
      %p183 = scmp.lt.s32.totalorder %s17, 3
      %p184 = pnand %p182, %p183
      %p185 = pneg %p184
      // Predicated region
      $region9: #{tpu_custom_call.1} parent=5 // pred_check
        _
      $region10: #{tpu_custom_call.1} parent=5 // pred_check_branch
        %187 = sbr.rel (%p184) target = $region12
      $region11: #{tpu_custom_call.1} parent=5 // pred_region
        %s188 = ssub.s32 %s17, 1
        // Predicated region
        $region13: #{tpu_custom_call.1} parent=11 // pred_check
          %p189 = pneg %p64
        $region14: #{tpu_custom_call.1} parent=11 // pred_check_branch
          %191 = sbr.rel (%p189) target = $region16
        $region15: #{tpu_custom_call.1} parent=11 // pred_region
          _
        $region16: #{tpu_custom_call.1} parent=11 // pred_fallthru
          _
        // Predicated region
        $region17: #{tpu_custom_call.1} parent=11 // pred_check
          %p192 = pneg %p85
        $region18: #{tpu_custom_call.1} parent=11 // pred_check_branch
          %194 = sbr.rel (%p192) target = $region20
        $region19: #{tpu_custom_call.1} parent=11 // pred_region
          %196 = vsyncadd [#allocation3], 0
          %s197 = sshll.u32 %s2, 4
          %s198 = int_to_ptr.hbm [resolvable:$true] %s197
          %s199 = sshll.u32 [#allocation2], 4
          %s200 = int_to_ptr.vmem [resolvable:$true] %s199
          %205 = dma.hbm_to_vmem [thread:$0]  %s198, 6144, %s200, [#allocation3], 256, 256, 16
        $region20: #{tpu_custom_call.1} parent=11 // pred_fallthru
          _
        // Predicated region
        $region21: #{tpu_custom_call.1} parent=11 // pred_check
          %p206 = pneg %p106
        $region22: #{tpu_custom_call.1} parent=11 // pred_check_branch
          %208 = sbr.rel (%p206) target = $region24
        $region23: #{tpu_custom_call.1} parent=11 // pred_region
          _
        $region24: #{tpu_custom_call.1} parent=11 // pred_fallthru
          _
        // Predicated region
        $region25: #{tpu_custom_call.1} parent=11 // pred_check
          %p209 = pneg %p127
        $region26: #{tpu_custom_call.1} parent=11 // pred_check_branch
          %211 = sbr.rel (%p209) target = $region28
        $region27: #{tpu_custom_call.1} parent=11 // pred_region
          %213 = vsyncadd [#allocation6], 0
          %s214 = sshll.u32 %s4, 4
          %s215 = int_to_ptr.hbm [resolvable:$true] %s214
          %s216 = sshll.u32 [#allocation5], 4
          %s217 = int_to_ptr.vmem [resolvable:$true] %s216
          %222 = dma.hbm_to_vmem [thread:$0]  %s215, 24576, %s217, [#allocation6], 256, 256, 16
        $region28: #{tpu_custom_call.1} parent=11 // pred_fallthru
          _
        // Predicated region
        $region29: #{tpu_custom_call.1} parent=11 // pred_check
          %p223 = pneg %p148
        $region30: #{tpu_custom_call.1} parent=11 // pred_check_branch
          %225 = sbr.rel (%p223) target = $region32
        $region31: #{tpu_custom_call.1} parent=11 // pred_region
          _
        $region32: #{tpu_custom_call.1} parent=11 // pred_fallthru
          _
      $region12: #{tpu_custom_call.1} parent=5 // pred_fallthru
        _
      %p226 = scmp.lt.s32.totalorder %s17, 2
      // Predicated region
      $region33: #{tpu_custom_call.1} parent=5 // pred_check
        %p227 = pneg %p226
      $region34: #{tpu_custom_call.1} parent=5 // pred_check_branch
        %229 = sbr.rel (%p227) target = $region36
      $region35: #{tpu_custom_call.1} parent=5 // pred_region
        // Predicated region
        $region37: #{tpu_custom_call.1} parent=35 // pred_check
          %p230 = pneg %p37
        $region38: #{tpu_custom_call.1} parent=35 // pred_check_branch
          %232 = sbr.rel (%p230) target = $region40
        $region39: #{tpu_custom_call.1} parent=35 // pred_region
          %p233 = scmp.lt.s32.totalorder %s17, 1
          %s234 = scalar_select %p233, %s17, 1
          %s235 = smul.addr %s234, 2
          %s236 = smul.addr %s235, 8
          %s237 = scalar_lea.vmem %s0, %s236
        $region40: #{tpu_custom_call.1} parent=35 // pred_fallthru
          _
      $region36: #{tpu_custom_call.1} parent=5 // pred_fallthru
        _
      %p238 = scmp.le.s32.totalorder 1, %s17
      %p239 = scmp.lt.s32.totalorder %s17, 3
      %p240 = pnand %p238, %p239
      %p241 = pneg %p240
      // Predicated region
      $region41: #{tpu_custom_call.1} parent=5 // pred_check
        _
      $region42: #{tpu_custom_call.1} parent=5 // pred_check_branch
        %243 = sbr.rel (%p240) target = $region44
      $region43: #{tpu_custom_call.1} parent=5 // pred_region
        %s244 = ssub.s32 %s17, 1
        // Predicated region
        $region45: #{tpu_custom_call.1} parent=43 // pred_check
          %p245 = pneg %p85
        $region46: #{tpu_custom_call.1} parent=43 // pred_check_branch
          %247 = sbr.rel (%p245) target = $region48
        $region47: #{tpu_custom_call.1} parent=43 // pred_region
          %249 = dma.done [#allocation3], 6144
        $region48: #{tpu_custom_call.1} parent=43 // pred_fallthru
          _
        // Predicated region
        $region49: #{tpu_custom_call.1} parent=43 // pred_check
          %p250 = pneg %p127
        $region50: #{tpu_custom_call.1} parent=43 // pred_check_branch
          %252 = sbr.rel (%p250) target = $region52
        $region51: #{tpu_custom_call.1} parent=43 // pred_region
          %254 = dma.done [#allocation6], 24576
        $region52: #{tpu_custom_call.1} parent=43 // pred_fallthru
          _
        %p255 = scmp.lt.s32.totalorder %s22, 1
        %s256 = scalar_select %p255, %s22, 1
        %s257 = smul.addr %s256, 2
        %s258 = smul.addr %s257, 8
        %s259 = scalar_lea.vmem %s0, %s258
        %p260 = pneg %p43
        %p261 = pneg %p40
        %p262 = pneg %p64
        %p263 = pneg %p61
        %p264 = pneg %p85
        %p265 = pneg %p82
        %p266 = pneg %p106
        %p267 = pneg %p103
        %p268 = pneg %p127
        %p269 = pneg %p124
        %p270 = pneg %p148
        %p271 = pneg %p145
        %p272 = pneg %p174
        %p273 = pneg %p171
        %s274 = sand.u32 %s161, 1
        %s275 = scalar_lea.sflag [#allocation4], %s274
        %s276 = sand.u32 %s161, 1
        %s277 = smul.addr %s276, 64
        %s278 = scalar_lea.vmem [#allocation7], %s277
        %p279 = scmp.lt.s32.totalorder %s22, 1
        %s280 = scalar_select %p279, %s22, 1
        %s281 = smul.addr %s280, 2
        %s282 = smul.addr %s281, 8
        %s283 = scalar_lea.vmem %s0, %s282
        %v284 = vld [vmem:[%s283] sm:$0xff]
        %v285 = vld [vmem:[%s283 + $0x8] sm:$0xff]
        %v286 = vld [vmem:[%s1] sm:$0xff]
        %v287 = vld [vmem:[%s1 + $0x8] sm:$0xff]
        %v288 = vld [vmem:[%s1 + $0x10] sm:$0xff]
        %v289 = vld [vmem:[%s1 + $0x18] sm:$0xff]
        %vm290 = vcmask 130048
        %v292 = vsel %vm290, %v286, 0
        %v295 = vsel %vm290, %v287, 0
        %v298 = vsel %vm290, %v288, 0
        %v301 = vsel %vm290, %v289, 0
        %303 = vmatpush.msra.mxu0 0.0
        %304 = vmatpush.msra.mxu0 0.0
        %305 = vmatpush.msra.mxu0 0.0
        %306 = vmatpush.msra.mxu0 0.0
        %307 = vmatpush.msra.mxu0 0.0
        %308 = vmatpush.msra.mxu0 0.0
        %309 = vmatpush.msra.mxu0 0.0
        %310 = vmatpush.msra.mxu0 0.0
        %311 = vmatpush.msra.mxu0 0.0
        %312 = vmatpush.msra.mxu0 0.0
        %313 = vmatpush.msra.mxu0 0.0
        %314 = vmatpush.msra.mxu0 0.0
        %315 = vmatpush.msra.mxu0 0.0
        %316 = vmatpush.msra.mxu0 0.0
        %317 = vmatpush.msra.mxu0 %v285
        %318 = vmatpush.msra.mxu0 %v284
        %319 = vmatmul.f32.gmra.mxu0 %v292
        %v320 = vpop.f32.mrf.mxu0
        %v321 = vadd.f32 0.0, %v320
        %322 = vmatmul.f32.gmra.mxu0 %v295
        %v323 = vpop.f32.mrf.mxu0
        %v324 = vadd.f32 0.0, %v323
        %325 = vmatmul.f32.gmra.mxu0 %v298
        %v326 = vpop.f32.mrf.mxu0
        %v327 = vadd.f32 0.0, %v326
        %328 = vmatmul.f32.gmra.mxu0 %v301
        %v329 = vpop.f32.mrf.mxu0
        %v330 = vadd.f32 0.0, %v329
        %331 = vdwg.mxu0
        %v332 = vld [vmem:[#allocation2] sm:$0xff]
        %v333 = vld [vmem:[#allocation2 + $0x8] sm:$0xff]
        %v334 = vld [vmem:[#allocation2 + $0x10] sm:$0xff]
        %v335 = vld [vmem:[#allocation2 + $0x18] sm:$0xff]
        %v336 = vld [vmem:[#allocation2 + $0x20] sm:$0xff]
        %v337 = vld [vmem:[#allocation2 + $0x28] sm:$0xff]
        %v338 = vld [vmem:[#allocation2 + $0x30] sm:$0xff]
        %v339 = vld [vmem:[#allocation2 + $0x38] sm:$0xff]
        %v340 = vld [vmem:[#allocation2 + $0x40] sm:$0xff]
        %v341 = vld [vmem:[#allocation2 + $0x48] sm:$0xff]
        %v342 = vld [vmem:[#allocation2 + $0x50] sm:$0xff]
        %v343 = vld [vmem:[#allocation2 + $0x58] sm:$0xff]
        %v344 = vld [vmem:[#allocation2 + $0x60] sm:$0xff]
        %v345 = vld [vmem:[#allocation2 + $0x68] sm:$0xff]
        %v346 = vld [vmem:[#allocation2 + $0x70] sm:$0xff]
        %v347 = vld [vmem:[#allocation2 + $0x78] sm:$0xff]
        %vm348 = vcmask 523264
        %v350 = vsel %vm348, %v321, 0
        %v353 = vsel %vm348, %v324, 0
        %v356 = vsel %vm348, %v327, 0
        %v359 = vsel %vm348, %v330, 0
        %361 = vmatpush.msra.mxu0 0.0
        %362 = vmatpush.msra.mxu0 0.0
        %363 = vmatpush.msra.mxu0 0.0
        %364 = vmatpush.msra.mxu0 0.0
        %365 = vmatpush.msra.mxu0 0.0
        %366 = vmatpush.msra.mxu0 0.0
        %367 = vmatpush.msra.mxu0 0.0
        %368 = vmatpush.msra.mxu0 0.0
        %369 = vmatpush.msra.mxu0 %v346
        %370 = vmatpush.msra.mxu0 %v344
        %371 = vmatpush.msra.mxu0 %v342
        %372 = vmatpush.msra.mxu0 %v340
        %373 = vmatpush.msra.mxu0 %v338
        %374 = vmatpush.msra.mxu0 %v336
        %375 = vmatpush.msra.mxu0 %v334
        %376 = vmatpush.msra.mxu0 %v332
        %377 = vmatmul.f32.gmra.mxu0 %v350
        %v378 = vpop.f32.mrf.mxu0
        %v379 = vadd.f32 0.0, %v378
        %380 = vmatmul.f32.gmra.mxu0 %v353
        %v381 = vpop.f32.mrf.mxu0
        %v382 = vadd.f32 0.0, %v381
        %383 = vmatmul.f32.gmra.mxu0 %v356
        %v384 = vpop.f32.mrf.mxu0
        %v385 = vadd.f32 0.0, %v384
        %386 = vmatmul.f32.gmra.mxu0 %v359
        %v387 = vpop.f32.mrf.mxu0
        %v388 = vadd.f32 0.0, %v387
        %389 = vdwg.mxu0
        %390 = vmatpush.msra.mxu0 0.0
        %391 = vmatpush.msra.mxu0 0.0
        %392 = vmatpush.msra.mxu0 0.0
        %393 = vmatpush.msra.mxu0 0.0
        %394 = vmatpush.msra.mxu0 0.0
        %395 = vmatpush.msra.mxu0 0.0
        %396 = vmatpush.msra.mxu0 0.0
        %397 = vmatpush.msra.mxu0 0.0
        %398 = vmatpush.msra.mxu0 %v347
        %399 = vmatpush.msra.mxu0 %v345
        %400 = vmatpush.msra.mxu0 %v343
        %401 = vmatpush.msra.mxu0 %v341
        %402 = vmatpush.msra.mxu0 %v339
        %403 = vmatpush.msra.mxu0 %v337
        %404 = vmatpush.msra.mxu0 %v335
        %405 = vmatpush.msra.mxu0 %v333
        %406 = vmatmul.f32.gmra.mxu0 %v350
        %v407 = vpop.f32.mrf.mxu0
        %v408 = vadd.f32 0.0, %v407
        %409 = vmatmul.f32.gmra.mxu0 %v353
        %v410 = vpop.f32.mrf.mxu0
        %v411 = vadd.f32 0.0, %v410
        %412 = vmatmul.f32.gmra.mxu0 %v356
        %v413 = vpop.f32.mrf.mxu0
        %v414 = vadd.f32 0.0, %v413
        %415 = vmatmul.f32.gmra.mxu0 %v359
        %v416 = vpop.f32.mrf.mxu0
        %v417 = vadd.f32 0.0, %v416
        %418 = vdwg.mxu0
        %s419 = scalar_lea.vmem [#allocation2], 128
        %v420 = vld [vmem:[%s419] sm:$0xff]
        %v421 = vld [vmem:[%s419 + $0x8] sm:$0xff]
        %v422 = vld [vmem:[%s419 + $0x10] sm:$0xff]
        %v423 = vld [vmem:[%s419 + $0x18] sm:$0xff]
        %v424 = vld [vmem:[%s419 + $0x20] sm:$0xff]
        %v425 = vld [vmem:[%s419 + $0x28] sm:$0xff]
        %v426 = vld [vmem:[%s419 + $0x30] sm:$0xff]
        %v427 = vld [vmem:[%s419 + $0x38] sm:$0xff]
        %v428 = vld [vmem:[%s419 + $0x40] sm:$0xff]
        %v429 = vld [vmem:[%s419 + $0x48] sm:$0xff]
        %v430 = vld [vmem:[%s419 + $0x50] sm:$0xff]
        %v431 = vld [vmem:[%s419 + $0x58] sm:$0xff]
        %v432 = vld [vmem:[%s419 + $0x60] sm:$0xff]
        %v433 = vld [vmem:[%s419 + $0x68] sm:$0xff]
        %v434 = vld [vmem:[%s419 + $0x70] sm:$0xff]
        %v435 = vld [vmem:[%s419 + $0x78] sm:$0xff]
        %s436 = scalar_lea.vmem [#allocation2], 256
        %v437 = vld [vmem:[%s436] sm:$0xff]
        %v438 = vld [vmem:[%s436 + $0x8] sm:$0xff]
        %v439 = vld [vmem:[%s436 + $0x10] sm:$0xff]
        %v440 = vld [vmem:[%s436 + $0x18] sm:$0xff]
        %v441 = vld [vmem:[%s436 + $0x20] sm:$0xff]
        %v442 = vld [vmem:[%s436 + $0x28] sm:$0xff]
        %v443 = vld [vmem:[%s436 + $0x30] sm:$0xff]
        %v444 = vld [vmem:[%s436 + $0x38] sm:$0xff]
        %v445 = vld [vmem:[%s436 + $0x40] sm:$0xff]
        %v446 = vld [vmem:[%s436 + $0x48] sm:$0xff]
        %v447 = vld [vmem:[%s436 + $0x50] sm:$0xff]
        %v448 = vld [vmem:[%s436 + $0x58] sm:$0xff]
        %v449 = vld [vmem:[%s436 + $0x60] sm:$0xff]
        %v450 = vld [vmem:[%s436 + $0x68] sm:$0xff]
        %v451 = vld [vmem:[%s436 + $0x70] sm:$0xff]
        %v452 = vld [vmem:[%s436 + $0x78] sm:$0xff]
        %453 = vmatpush.msra.mxu0 0.0
        %454 = vmatpush.msra.mxu0 0.0
        %455 = vmatpush.msra.mxu0 0.0
        %456 = vmatpush.msra.mxu0 0.0
        %457 = vmatpush.msra.mxu0 0.0
        %458 = vmatpush.msra.mxu0 0.0
        %459 = vmatpush.msra.mxu0 0.0
        %460 = vmatpush.msra.mxu0 0.0
        %461 = vmatpush.msra.mxu0 %v451
        %462 = vmatpush.msra.mxu0 %v449
        %463 = vmatpush.msra.mxu0 %v447
        %464 = vmatpush.msra.mxu0 %v445
        %465 = vmatpush.msra.mxu0 %v443
        %466 = vmatpush.msra.mxu0 %v441
        %467 = vmatpush.msra.mxu0 %v439
        %468 = vmatpush.msra.mxu0 %v437
        %469 = vmatmul.f32.gmra.mxu0 %v350
        %v470 = vpop.f32.mrf.mxu0
        %v471 = vadd.f32 0.0, %v470
        %472 = vmatmul.f32.gmra.mxu0 %v353
        %v473 = vpop.f32.mrf.mxu0
        %v474 = vadd.f32 0.0, %v473
        %475 = vmatmul.f32.gmra.mxu0 %v356
        %v476 = vpop.f32.mrf.mxu0
        %v477 = vadd.f32 0.0, %v476
        %478 = vmatmul.f32.gmra.mxu0 %v359
        %v479 = vpop.f32.mrf.mxu0
        %v480 = vadd.f32 0.0, %v479
        %481 = vdwg.mxu0
        %482 = vmatpush.msra.mxu0 0.0
        %483 = vmatpush.msra.mxu0 0.0
        %484 = vmatpush.msra.mxu0 0.0
        %485 = vmatpush.msra.mxu0 0.0
        %486 = vmatpush.msra.mxu0 0.0
        %487 = vmatpush.msra.mxu0 0.0
        %488 = vmatpush.msra.mxu0 0.0
        %489 = vmatpush.msra.mxu0 0.0
        %490 = vmatpush.msra.mxu0 %v452
        %491 = vmatpush.msra.mxu0 %v450
        %492 = vmatpush.msra.mxu0 %v448
        %493 = vmatpush.msra.mxu0 %v446
        %494 = vmatpush.msra.mxu0 %v444
        %495 = vmatpush.msra.mxu0 %v442
        %496 = vmatpush.msra.mxu0 %v440
        %497 = vmatpush.msra.mxu0 %v438
        %498 = vmatmul.f32.gmra.mxu0 %v350
        %v499 = vpop.f32.mrf.mxu0
        %v500 = vadd.f32 0.0, %v499
        %501 = vmatmul.f32.gmra.mxu0 %v353
        %v502 = vpop.f32.mrf.mxu0
        %v503 = vadd.f32 0.0, %v502
        %504 = vmatmul.f32.gmra.mxu0 %v356
        %v505 = vpop.f32.mrf.mxu0
        %v506 = vadd.f32 0.0, %v505
        %507 = vmatmul.f32.gmra.mxu0 %v359
        %v508 = vpop.f32.mrf.mxu0
        %v509 = vadd.f32 0.0, %v508
        %510 = vdwg.mxu0
        %vm519 = vcmask 1040384
        %v520 = vrot.slane %v379, 7
        %v521 = vrot.slane %v408, 7
        %v522 = vrot.slane %v382, 7
        %v523 = vsel %vm519, %v520, %v522
        %v524 = vrot.slane %v411, 7
        %v525 = vsel %vm519, %v521, %v524
        %v526 = vrot.slane %v385, 7
        %v527 = vsel %vm519, %v522, %v526
        %v528 = vrot.slane %v414, 7
        %v529 = vsel %vm519, %v524, %v528
        %v530 = vrot.slane %v388, 7
        %v531 = vsel %vm519, %v526, %v530
        %v532 = vrot.slane %v417, 7
        %v533 = vsel %vm519, %v528, %v532
        %v542 = vsel %vm519, 0.0, %v520
        %v543 = vsel %vm519, 0.0, %v521
        %544 = vmatpush.msra.mxu0 0.0
        %545 = vmatpush.msra.mxu0 0.0
        %546 = vmatpush.msra.mxu0 0.0
        %547 = vmatpush.msra.mxu0 0.0
        %548 = vmatpush.msra.mxu0 0.0
        %549 = vmatpush.msra.mxu0 0.0
        %550 = vmatpush.msra.mxu0 0.0
        %551 = vmatpush.msra.mxu0 0.0
        %552 = vmatpush.msra.mxu0 %v434
        %553 = vmatpush.msra.mxu0 %v432
        %554 = vmatpush.msra.mxu0 %v430
        %555 = vmatpush.msra.mxu0 %v428
        %556 = vmatpush.msra.mxu0 %v426
        %557 = vmatpush.msra.mxu0 %v424
        %558 = vmatpush.msra.mxu0 %v422
        %559 = vmatpush.msra.mxu0 %v420
        %560 = vmatmul.f32.gmra.mxu0 %v350
        %v561 = vpop.f32.mrf.mxu0
        %v562 = vadd.f32 %v542, %v561
        %563 = vmatmul.f32.gmra.mxu0 %v353
        %v564 = vpop.f32.mrf.mxu0
        %v565 = vadd.f32 %v523, %v564
        %566 = vmatmul.f32.gmra.mxu0 %v356
        %v567 = vpop.f32.mrf.mxu0
        %v568 = vadd.f32 %v527, %v567
        %569 = vmatmul.f32.gmra.mxu0 %v359
        %v570 = vpop.f32.mrf.mxu0
        %v571 = vadd.f32 %v531, %v570
        %572 = vdwg.mxu0
        %573 = vmatpush.msra.mxu0 0.0
        %574 = vmatpush.msra.mxu0 0.0
        %575 = vmatpush.msra.mxu0 0.0
        %576 = vmatpush.msra.mxu0 0.0
        %577 = vmatpush.msra.mxu0 0.0
        %578 = vmatpush.msra.mxu0 0.0
        %579 = vmatpush.msra.mxu0 0.0
        %580 = vmatpush.msra.mxu0 0.0
        %581 = vmatpush.msra.mxu0 %v435
        %582 = vmatpush.msra.mxu0 %v433
        %583 = vmatpush.msra.mxu0 %v431
        %584 = vmatpush.msra.mxu0 %v429
        %585 = vmatpush.msra.mxu0 %v427
        %586 = vmatpush.msra.mxu0 %v425
        %587 = vmatpush.msra.mxu0 %v423
        %588 = vmatpush.msra.mxu0 %v421
        %589 = vmatmul.f32.gmra.mxu0 %v350
        %v590 = vpop.f32.mrf.mxu0
        %v591 = vadd.f32 %v543, %v590
        %592 = vmatmul.f32.gmra.mxu0 %v353
        %v593 = vpop.f32.mrf.mxu0
        %v594 = vadd.f32 %v525, %v593
        %595 = vmatmul.f32.gmra.mxu0 %v356
        %v596 = vpop.f32.mrf.mxu0
        %v597 = vadd.f32 %v529, %v596
        %598 = vmatmul.f32.gmra.mxu0 %v359
        %v599 = vpop.f32.mrf.mxu0
        %v600 = vadd.f32 %v533, %v599
        %601 = vdwg.mxu0
        %vm610 = vcmask 1046528
        %v611 = vrot.slane %v471, 1
        %v612 = vrot.slane %v474, 1
        %v613 = vsel %vm610, %v611, %v612
        %v614 = vrot.slane %v500, 1
        %v615 = vrot.slane %v503, 1
        %v616 = vsel %vm610, %v614, %v615
        %v617 = vrot.slane %v477, 1
        %v618 = vsel %vm610, %v612, %v617
        %v619 = vrot.slane %v506, 1
        %v620 = vsel %vm610, %v615, %v619
        %v621 = vrot.slane %v480, 1
        %v622 = vsel %vm610, %v617, %v621
        %v623 = vrot.slane %v509, 1
        %v624 = vsel %vm610, %v619, %v623
        %v633 = vsel %vm610, %v621, 0.0
        %v634 = vsel %vm610, %v623, 0.0
        %v635 = vadd.f32 %v562, %v613
        %v636 = vadd.f32 %v591, %v616
        %v637 = vadd.f32 %v565, %v618
        %v638 = vadd.f32 %v594, %v620
        %v639 = vadd.f32 %v568, %v622
        %v640 = vadd.f32 %v597, %v624
        %v641 = vadd.f32 %v571, %v633
        %v642 = vadd.f32 %v600, %v634
        %v643 = vld [vmem:[%s3] sm:$0x3]
        %v645 = vperm.slane %v643, 0
        %v646 = vperm.slane %v643, 1
        %v649 = vadd.f32 %v635, %v645
        %v650 = vadd.f32 %v636, %v646
        %v651 = vadd.f32 %v637, %v645
        %v652 = vadd.f32 %v638, %v646
        %v653 = vadd.f32 %v639, %v645
        %v654 = vadd.f32 %v640, %v646
        %v655 = vadd.f32 %v641, %v645
        %v656 = vadd.f32 %v642, %v646
        %v657 = vmax.f32 %v649, 0.0
        %v658 = vmax.f32 %v650, 0.0
        %v659 = vmax.f32 %v651, 0.0
        %v660 = vmax.f32 %v652, 0.0
        %v661 = vmax.f32 %v653, 0.0
        %v662 = vmax.f32 %v654, 0.0
        %v663 = vmax.f32 %v655, 0.0
        %v664 = vmax.f32 %v656, 0.0
        %v665 = vld [vmem:[#allocation5] sm:$0xff]
        %v666 = vld [vmem:[#allocation5 + $0x8] sm:$0xff]
        %v667 = vld [vmem:[#allocation5 + $0x10] sm:$0xff]
        %v668 = vld [vmem:[#allocation5 + $0x18] sm:$0xff]
        %v669 = vld [vmem:[#allocation5 + $0x20] sm:$0xff]
        %v670 = vld [vmem:[#allocation5 + $0x28] sm:$0xff]
        %v671 = vld [vmem:[#allocation5 + $0x30] sm:$0xff]
        %v672 = vld [vmem:[#allocation5 + $0x38] sm:$0xff]
        %v673 = vld [vmem:[#allocation5 + $0x40] sm:$0xff]
        %v674 = vld [vmem:[#allocation5 + $0x48] sm:$0xff]
        %v675 = vld [vmem:[#allocation5 + $0x50] sm:$0xff]
        %v676 = vld [vmem:[#allocation5 + $0x58] sm:$0xff]
        %v677 = vld [vmem:[#allocation5 + $0x60] sm:$0xff]
        %v678 = vld [vmem:[#allocation5 + $0x68] sm:$0xff]
        %v679 = vld [vmem:[#allocation5 + $0x70] sm:$0xff]
        %v680 = vld [vmem:[#allocation5 + $0x78] sm:$0xff]
        %v681 = vld [vmem:[#allocation5 + $0x80] sm:$0xff]
        %v682 = vld [vmem:[#allocation5 + $0x88] sm:$0xff]
        %v683 = vld [vmem:[#allocation5 + $0x90] sm:$0xff]
        %v684 = vld [vmem:[#allocation5 + $0x98] sm:$0xff]
        %v685 = vld [vmem:[#allocation5 + $0xa0] sm:$0xff]
        %v686 = vld [vmem:[#allocation5 + $0xa8] sm:$0xff]
        %v687 = vld [vmem:[#allocation5 + $0xb0] sm:$0xff]
        %v688 = vld [vmem:[#allocation5 + $0xb8] sm:$0xff]
        %v689 = vld [vmem:[#allocation5 + $0xc0] sm:$0xff]
        %v690 = vld [vmem:[#allocation5 + $0xc8] sm:$0xff]
        %v691 = vld [vmem:[#allocation5 + $0xd0] sm:$0xff]
        %v692 = vld [vmem:[#allocation5 + $0xd8] sm:$0xff]
        %v693 = vld [vmem:[#allocation5 + $0xe0] sm:$0xff]
        %v694 = vld [vmem:[#allocation5 + $0xe8] sm:$0xff]
        %v695 = vld [vmem:[#allocation5 + $0xf0] sm:$0xff]
        %v696 = vld [vmem:[#allocation5 + $0xf8] sm:$0xff]
        %v697 = vld [vmem:[#allocation5 + $0x100] sm:$0xff]
        %v698 = vld [vmem:[#allocation5 + $0x108] sm:$0xff]
        %v699 = vld [vmem:[#allocation5 + $0x110] sm:$0xff]
        %v700 = vld [vmem:[#allocation5 + $0x118] sm:$0xff]
        %v701 = vld [vmem:[#allocation5 + $0x120] sm:$0xff]
        %v702 = vld [vmem:[#allocation5 + $0x128] sm:$0xff]
        %v703 = vld [vmem:[#allocation5 + $0x130] sm:$0xff]
        %v704 = vld [vmem:[#allocation5 + $0x138] sm:$0xff]
        %v705 = vld [vmem:[#allocation5 + $0x140] sm:$0xff]
        %v706 = vld [vmem:[#allocation5 + $0x148] sm:$0xff]
        %v707 = vld [vmem:[#allocation5 + $0x150] sm:$0xff]
        %v708 = vld [vmem:[#allocation5 + $0x158] sm:$0xff]
        %v709 = vld [vmem:[#allocation5 + $0x160] sm:$0xff]
        %v710 = vld [vmem:[#allocation5 + $0x168] sm:$0xff]
        %v711 = vld [vmem:[#allocation5 + $0x170] sm:$0xff]
        %v712 = vld [vmem:[#allocation5 + $0x178] sm:$0xff]
        %v713 = vld [vmem:[#allocation5 + $0x180] sm:$0xff]
        %v714 = vld [vmem:[#allocation5 + $0x188] sm:$0xff]
        %v715 = vld [vmem:[#allocation5 + $0x190] sm:$0xff]
        %v716 = vld [vmem:[#allocation5 + $0x198] sm:$0xff]
        %v717 = vld [vmem:[#allocation5 + $0x1a0] sm:$0xff]
        %v718 = vld [vmem:[#allocation5 + $0x1a8] sm:$0xff]
        %v719 = vld [vmem:[#allocation5 + $0x1b0] sm:$0xff]
        %v720 = vld [vmem:[#allocation5 + $0x1b8] sm:$0xff]
        %v721 = vld [vmem:[#allocation5 + $0x1c0] sm:$0xff]
        %v722 = vld [vmem:[#allocation5 + $0x1c8] sm:$0xff]
        %v723 = vld [vmem:[#allocation5 + $0x1d0] sm:$0xff]
        %v724 = vld [vmem:[#allocation5 + $0x1d8] sm:$0xff]
        %v725 = vld [vmem:[#allocation5 + $0x1e0] sm:$0xff]
        %v726 = vld [vmem:[#allocation5 + $0x1e8] sm:$0xff]
        %v727 = vld [vmem:[#allocation5 + $0x1f0] sm:$0xff]
        %v728 = vld [vmem:[#allocation5 + $0x1f8] sm:$0xff]
        %729 = vmatpush.msra.mxu0 %v695
        %730 = vmatpush.msra.mxu0 %v693
        %731 = vmatpush.msra.mxu0 %v691
        %732 = vmatpush.msra.mxu0 %v689
        %733 = vmatpush.msra.mxu0 %v687
        %734 = vmatpush.msra.mxu0 %v685
        %735 = vmatpush.msra.mxu0 %v683
        %736 = vmatpush.msra.mxu0 %v681
        %737 = vmatpush.msra.mxu0 %v679
        %738 = vmatpush.msra.mxu0 %v677
        %739 = vmatpush.msra.mxu0 %v675
        %740 = vmatpush.msra.mxu0 %v673
        %741 = vmatpush.msra.mxu0 %v671
        %742 = vmatpush.msra.mxu0 %v669
        %743 = vmatpush.msra.mxu0 %v667
        %744 = vmatpush.msra.mxu0 %v665
        %745 = vmatmul.f32.gmra.mxu0 %v657
        %v746 = vpop.f32.mrf.mxu0
        %v747 = vadd.f32 0.0, %v746
        %748 = vmatmul.f32.gmra.mxu0 %v659
        %v749 = vpop.f32.mrf.mxu0
        %v750 = vadd.f32 0.0, %v749
        %751 = vmatmul.f32.gmra.mxu0 %v661
        %v752 = vpop.f32.mrf.mxu0
        %v753 = vadd.f32 0.0, %v752
        %754 = vmatmul.f32.gmra.mxu0 %v663
        %v755 = vpop.f32.mrf.mxu0
        %v756 = vadd.f32 0.0, %v755
        %757 = vdwg.mxu0
        %758 = vmatpush.msra.mxu0 %v727
        %759 = vmatpush.msra.mxu0 %v725
        %760 = vmatpush.msra.mxu0 %v723
        %761 = vmatpush.msra.mxu0 %v721
        %762 = vmatpush.msra.mxu0 %v719
        %763 = vmatpush.msra.mxu0 %v717
        %764 = vmatpush.msra.mxu0 %v715
        %765 = vmatpush.msra.mxu0 %v713
        %766 = vmatpush.msra.mxu0 %v711
        %767 = vmatpush.msra.mxu0 %v709
        %768 = vmatpush.msra.mxu0 %v707
        %769 = vmatpush.msra.mxu0 %v705
        %770 = vmatpush.msra.mxu0 %v703
        %771 = vmatpush.msra.mxu0 %v701
        %772 = vmatpush.msra.mxu0 %v699
        %773 = vmatpush.msra.mxu0 %v697
        %774 = vmatmul.f32.gmra.mxu0 %v658
        %v775 = vpop.f32.mrf.mxu0
        %v776 = vadd.f32 %v747, %v775
        %777 = vmatmul.f32.gmra.mxu0 %v660
        %v778 = vpop.f32.mrf.mxu0
        %v779 = vadd.f32 %v750, %v778
        %780 = vmatmul.f32.gmra.mxu0 %v662
        %v781 = vpop.f32.mrf.mxu0
        %v782 = vadd.f32 %v753, %v781
        %783 = vmatmul.f32.gmra.mxu0 %v664
        %v784 = vpop.f32.mrf.mxu0
        %v785 = vadd.f32 %v756, %v784
        %786 = vdwg.mxu0
        %787 = vmatpush.msra.mxu0 %v696
        %788 = vmatpush.msra.mxu0 %v694
        %789 = vmatpush.msra.mxu0 %v692
        %790 = vmatpush.msra.mxu0 %v690
        %791 = vmatpush.msra.mxu0 %v688
        %792 = vmatpush.msra.mxu0 %v686
        %793 = vmatpush.msra.mxu0 %v684
        %794 = vmatpush.msra.mxu0 %v682
        %795 = vmatpush.msra.mxu0 %v680
        %796 = vmatpush.msra.mxu0 %v678
        %797 = vmatpush.msra.mxu0 %v676
        %798 = vmatpush.msra.mxu0 %v674
        %799 = vmatpush.msra.mxu0 %v672
        %800 = vmatpush.msra.mxu0 %v670
        %801 = vmatpush.msra.mxu0 %v668
        %802 = vmatpush.msra.mxu0 %v666
        %803 = vmatmul.f32.gmra.mxu0 %v657
        %v804 = vpop.f32.mrf.mxu0
        %v805 = vadd.f32 0.0, %v804
        %806 = vmatmul.f32.gmra.mxu0 %v659
        %v807 = vpop.f32.mrf.mxu0
        %v808 = vadd.f32 0.0, %v807
        %809 = vmatmul.f32.gmra.mxu0 %v661
        %v810 = vpop.f32.mrf.mxu0
        %v811 = vadd.f32 0.0, %v810
        %812 = vmatmul.f32.gmra.mxu0 %v663
        %v813 = vpop.f32.mrf.mxu0
        %v814 = vadd.f32 0.0, %v813
        %815 = vdwg.mxu0
        %816 = vmatpush.msra.mxu0 %v728
        %817 = vmatpush.msra.mxu0 %v726
        %818 = vmatpush.msra.mxu0 %v724
        %819 = vmatpush.msra.mxu0 %v722
        %820 = vmatpush.msra.mxu0 %v720
        %821 = vmatpush.msra.mxu0 %v718
        %822 = vmatpush.msra.mxu0 %v716
        %823 = vmatpush.msra.mxu0 %v714
        %824 = vmatpush.msra.mxu0 %v712
        %825 = vmatpush.msra.mxu0 %v710
        %826 = vmatpush.msra.mxu0 %v708
        %827 = vmatpush.msra.mxu0 %v706
        %828 = vmatpush.msra.mxu0 %v704
        %829 = vmatpush.msra.mxu0 %v702
        %830 = vmatpush.msra.mxu0 %v700
        %831 = vmatpush.msra.mxu0 %v698
        %832 = vmatmul.f32.gmra.mxu0 %v658
        %v833 = vpop.f32.mrf.mxu0
        %v834 = vadd.f32 %v805, %v833
        %835 = vmatmul.f32.gmra.mxu0 %v660
        %v836 = vpop.f32.mrf.mxu0
        %v837 = vadd.f32 %v808, %v836
        %838 = vmatmul.f32.gmra.mxu0 %v662
        %v839 = vpop.f32.mrf.mxu0
        %v840 = vadd.f32 %v811, %v839
        %841 = vmatmul.f32.gmra.mxu0 %v664
        %v842 = vpop.f32.mrf.mxu0
        %v843 = vadd.f32 %v814, %v842
        %844 = vdwg.mxu0
        %s845 = scalar_lea.vmem [#allocation5], 512
        %v846 = vld [vmem:[%s845] sm:$0xff]
        %v847 = vld [vmem:[%s845 + $0x8] sm:$0xff]
        %v848 = vld [vmem:[%s845 + $0x10] sm:$0xff]
        %v849 = vld [vmem:[%s845 + $0x18] sm:$0xff]
        %v850 = vld [vmem:[%s845 + $0x20] sm:$0xff]
        %v851 = vld [vmem:[%s845 + $0x28] sm:$0xff]
        %v852 = vld [vmem:[%s845 + $0x30] sm:$0xff]
        %v853 = vld [vmem:[%s845 + $0x38] sm:$0xff]
        %v854 = vld [vmem:[%s845 + $0x40] sm:$0xff]
        %v855 = vld [vmem:[%s845 + $0x48] sm:$0xff]
        %v856 = vld [vmem:[%s845 + $0x50] sm:$0xff]
        %v857 = vld [vmem:[%s845 + $0x58] sm:$0xff]
        %v858 = vld [vmem:[%s845 + $0x60] sm:$0xff]
        %v859 = vld [vmem:[%s845 + $0x68] sm:$0xff]
        %v860 = vld [vmem:[%s845 + $0x70] sm:$0xff]
        %v861 = vld [vmem:[%s845 + $0x78] sm:$0xff]
        %v862 = vld [vmem:[%s845 + $0x80] sm:$0xff]
        %v863 = vld [vmem:[%s845 + $0x88] sm:$0xff]
        %v864 = vld [vmem:[%s845 + $0x90] sm:$0xff]
        %v865 = vld [vmem:[%s845 + $0x98] sm:$0xff]
        %v866 = vld [vmem:[%s845 + $0xa0] sm:$0xff]
        %v867 = vld [vmem:[%s845 + $0xa8] sm:$0xff]
        %v868 = vld [vmem:[%s845 + $0xb0] sm:$0xff]
        %v869 = vld [vmem:[%s845 + $0xb8] sm:$0xff]
        %v870 = vld [vmem:[%s845 + $0xc0] sm:$0xff]
        %v871 = vld [vmem:[%s845 + $0xc8] sm:$0xff]
        %v872 = vld [vmem:[%s845 + $0xd0] sm:$0xff]
        %v873 = vld [vmem:[%s845 + $0xd8] sm:$0xff]
        %v874 = vld [vmem:[%s845 + $0xe0] sm:$0xff]
        %v875 = vld [vmem:[%s845 + $0xe8] sm:$0xff]
        %v876 = vld [vmem:[%s845 + $0xf0] sm:$0xff]
        %v877 = vld [vmem:[%s845 + $0xf8] sm:$0xff]
        %v878 = vld [vmem:[%s845 + $0x100] sm:$0xff]
        %v879 = vld [vmem:[%s845 + $0x108] sm:$0xff]
        %v880 = vld [vmem:[%s845 + $0x110] sm:$0xff]
        %v881 = vld [vmem:[%s845 + $0x118] sm:$0xff]
        %v882 = vld [vmem:[%s845 + $0x120] sm:$0xff]
        %v883 = vld [vmem:[%s845 + $0x128] sm:$0xff]
        %v884 = vld [vmem:[%s845 + $0x130] sm:$0xff]
        %v885 = vld [vmem:[%s845 + $0x138] sm:$0xff]
        %v886 = vld [vmem:[%s845 + $0x140] sm:$0xff]
        %v887 = vld [vmem:[%s845 + $0x148] sm:$0xff]
        %v888 = vld [vmem:[%s845 + $0x150] sm:$0xff]
        %v889 = vld [vmem:[%s845 + $0x158] sm:$0xff]
        %v890 = vld [vmem:[%s845 + $0x160] sm:$0xff]
        %v891 = vld [vmem:[%s845 + $0x168] sm:$0xff]
        %v892 = vld [vmem:[%s845 + $0x170] sm:$0xff]
        %v893 = vld [vmem:[%s845 + $0x178] sm:$0xff]
        %v894 = vld [vmem:[%s845 + $0x180] sm:$0xff]
        %v895 = vld [vmem:[%s845 + $0x188] sm:$0xff]
        %v896 = vld [vmem:[%s845 + $0x190] sm:$0xff]
        %v897 = vld [vmem:[%s845 + $0x198] sm:$0xff]
        %v898 = vld [vmem:[%s845 + $0x1a0] sm:$0xff]
        %v899 = vld [vmem:[%s845 + $0x1a8] sm:$0xff]
        %v900 = vld [vmem:[%s845 + $0x1b0] sm:$0xff]
        %v901 = vld [vmem:[%s845 + $0x1b8] sm:$0xff]
        %v902 = vld [vmem:[%s845 + $0x1c0] sm:$0xff]
        %v903 = vld [vmem:[%s845 + $0x1c8] sm:$0xff]
        %v904 = vld [vmem:[%s845 + $0x1d0] sm:$0xff]
        %v905 = vld [vmem:[%s845 + $0x1d8] sm:$0xff]
        %v906 = vld [vmem:[%s845 + $0x1e0] sm:$0xff]
        %v907 = vld [vmem:[%s845 + $0x1e8] sm:$0xff]
        %v908 = vld [vmem:[%s845 + $0x1f0] sm:$0xff]
        %v909 = vld [vmem:[%s845 + $0x1f8] sm:$0xff]
        %s910 = scalar_lea.vmem [#allocation5], 1024
        %v911 = vld [vmem:[%s910] sm:$0xff]
        %v912 = vld [vmem:[%s910 + $0x8] sm:$0xff]
        %v913 = vld [vmem:[%s910 + $0x10] sm:$0xff]
        %v914 = vld [vmem:[%s910 + $0x18] sm:$0xff]
        %v915 = vld [vmem:[%s910 + $0x20] sm:$0xff]
        %v916 = vld [vmem:[%s910 + $0x28] sm:$0xff]
        %v917 = vld [vmem:[%s910 + $0x30] sm:$0xff]
        %v918 = vld [vmem:[%s910 + $0x38] sm:$0xff]
        %v919 = vld [vmem:[%s910 + $0x40] sm:$0xff]
        %v920 = vld [vmem:[%s910 + $0x48] sm:$0xff]
        %v921 = vld [vmem:[%s910 + $0x50] sm:$0xff]
        %v922 = vld [vmem:[%s910 + $0x58] sm:$0xff]
        %v923 = vld [vmem:[%s910 + $0x60] sm:$0xff]
        %v924 = vld [vmem:[%s910 + $0x68] sm:$0xff]
        %v925 = vld [vmem:[%s910 + $0x70] sm:$0xff]
        %v926 = vld [vmem:[%s910 + $0x78] sm:$0xff]
        %v927 = vld [vmem:[%s910 + $0x80] sm:$0xff]
        %v928 = vld [vmem:[%s910 + $0x88] sm:$0xff]
        %v929 = vld [vmem:[%s910 + $0x90] sm:$0xff]
        %v930 = vld [vmem:[%s910 + $0x98] sm:$0xff]
        %v931 = vld [vmem:[%s910 + $0xa0] sm:$0xff]
        %v932 = vld [vmem:[%s910 + $0xa8] sm:$0xff]
        %v933 = vld [vmem:[%s910 + $0xb0] sm:$0xff]
        %v934 = vld [vmem:[%s910 + $0xb8] sm:$0xff]
        %v935 = vld [vmem:[%s910 + $0xc0] sm:$0xff]
        %v936 = vld [vmem:[%s910 + $0xc8] sm:$0xff]
        %v937 = vld [vmem:[%s910 + $0xd0] sm:$0xff]
        %v938 = vld [vmem:[%s910 + $0xd8] sm:$0xff]
        %v939 = vld [vmem:[%s910 + $0xe0] sm:$0xff]
        %v940 = vld [vmem:[%s910 + $0xe8] sm:$0xff]
        %v941 = vld [vmem:[%s910 + $0xf0] sm:$0xff]
        %v942 = vld [vmem:[%s910 + $0xf8] sm:$0xff]
        %v943 = vld [vmem:[%s910 + $0x100] sm:$0xff]
        %v944 = vld [vmem:[%s910 + $0x108] sm:$0xff]
        %v945 = vld [vmem:[%s910 + $0x110] sm:$0xff]
        %v946 = vld [vmem:[%s910 + $0x118] sm:$0xff]
        %v947 = vld [vmem:[%s910 + $0x120] sm:$0xff]
        %v948 = vld [vmem:[%s910 + $0x128] sm:$0xff]
        %v949 = vld [vmem:[%s910 + $0x130] sm:$0xff]
        %v950 = vld [vmem:[%s910 + $0x138] sm:$0xff]
        %v951 = vld [vmem:[%s910 + $0x140] sm:$0xff]
        %v952 = vld [vmem:[%s910 + $0x148] sm:$0xff]
        %v953 = vld [vmem:[%s910 + $0x150] sm:$0xff]
        %v954 = vld [vmem:[%s910 + $0x158] sm:$0xff]
        %v955 = vld [vmem:[%s910 + $0x160] sm:$0xff]
        %v956 = vld [vmem:[%s910 + $0x168] sm:$0xff]
        %v957 = vld [vmem:[%s910 + $0x170] sm:$0xff]
        %v958 = vld [vmem:[%s910 + $0x178] sm:$0xff]
        %v959 = vld [vmem:[%s910 + $0x180] sm:$0xff]
        %v960 = vld [vmem:[%s910 + $0x188] sm:$0xff]
        %v961 = vld [vmem:[%s910 + $0x190] sm:$0xff]
        %v962 = vld [vmem:[%s910 + $0x198] sm:$0xff]
        %v963 = vld [vmem:[%s910 + $0x1a0] sm:$0xff]
        %v964 = vld [vmem:[%s910 + $0x1a8] sm:$0xff]
        %v965 = vld [vmem:[%s910 + $0x1b0] sm:$0xff]
        %v966 = vld [vmem:[%s910 + $0x1b8] sm:$0xff]
        %v967 = vld [vmem:[%s910 + $0x1c0] sm:$0xff]
        %v968 = vld [vmem:[%s910 + $0x1c8] sm:$0xff]
        %v969 = vld [vmem:[%s910 + $0x1d0] sm:$0xff]
        %v970 = vld [vmem:[%s910 + $0x1d8] sm:$0xff]
        %v971 = vld [vmem:[%s910 + $0x1e0] sm:$0xff]
        %v972 = vld [vmem:[%s910 + $0x1e8] sm:$0xff]
        %v973 = vld [vmem:[%s910 + $0x1f0] sm:$0xff]
        %v974 = vld [vmem:[%s910 + $0x1f8] sm:$0xff]
        %975 = vmatpush.msra.mxu0 %v941
        %976 = vmatpush.msra.mxu0 %v939
        %977 = vmatpush.msra.mxu0 %v937
        %978 = vmatpush.msra.mxu0 %v935
        %979 = vmatpush.msra.mxu0 %v933
        %980 = vmatpush.msra.mxu0 %v931
        %981 = vmatpush.msra.mxu0 %v929
        %982 = vmatpush.msra.mxu0 %v927
        %983 = vmatpush.msra.mxu0 %v925
        %984 = vmatpush.msra.mxu0 %v923
        %985 = vmatpush.msra.mxu0 %v921
        %986 = vmatpush.msra.mxu0 %v919
        %987 = vmatpush.msra.mxu0 %v917
        %988 = vmatpush.msra.mxu0 %v915
        %989 = vmatpush.msra.mxu0 %v913
        %990 = vmatpush.msra.mxu0 %v911
        %991 = vmatmul.f32.gmra.mxu0 %v657
        %v992 = vpop.f32.mrf.mxu0
        %v993 = vadd.f32 0.0, %v992
        %994 = vmatmul.f32.gmra.mxu0 %v659
        %v995 = vpop.f32.mrf.mxu0
        %v996 = vadd.f32 0.0, %v995
        %997 = vmatmul.f32.gmra.mxu0 %v661
        %v998 = vpop.f32.mrf.mxu0
        %v999 = vadd.f32 0.0, %v998
        %1000 = vmatmul.f32.gmra.mxu0 %v663
        %v1001 = vpop.f32.mrf.mxu0
        %v1002 = vadd.f32 0.0, %v1001
        %1003 = vdwg.mxu0
        %1004 = vmatpush.msra.mxu0 %v973
        %1005 = vmatpush.msra.mxu0 %v971
        %1006 = vmatpush.msra.mxu0 %v969
        %1007 = vmatpush.msra.mxu0 %v967
        %1008 = vmatpush.msra.mxu0 %v965
        %1009 = vmatpush.msra.mxu0 %v963
        %1010 = vmatpush.msra.mxu0 %v961
        %1011 = vmatpush.msra.mxu0 %v959
        %1012 = vmatpush.msra.mxu0 %v957
        %1013 = vmatpush.msra.mxu0 %v955
        %1014 = vmatpush.msra.mxu0 %v953
        %1015 = vmatpush.msra.mxu0 %v951
        %1016 = vmatpush.msra.mxu0 %v949
        %1017 = vmatpush.msra.mxu0 %v947
        %1018 = vmatpush.msra.mxu0 %v945
        %1019 = vmatpush.msra.mxu0 %v943
        %1020 = vmatmul.f32.gmra.mxu0 %v658
        %v1021 = vpop.f32.mrf.mxu0
        %v1022 = vadd.f32 %v993, %v1021
        %1023 = vmatmul.f32.gmra.mxu0 %v660
        %v1024 = vpop.f32.mrf.mxu0
        %v1025 = vadd.f32 %v996, %v1024
        %1026 = vmatmul.f32.gmra.mxu0 %v662
        %v1027 = vpop.f32.mrf.mxu0
        %v1028 = vadd.f32 %v999, %v1027
        %1029 = vmatmul.f32.gmra.mxu0 %v664
        %v1030 = vpop.f32.mrf.mxu0
        %v1031 = vadd.f32 %v1002, %v1030
        %1032 = vdwg.mxu0
        %1033 = vmatpush.msra.mxu0 %v942
        %1034 = vmatpush.msra.mxu0 %v940
        %1035 = vmatpush.msra.mxu0 %v938
        %1036 = vmatpush.msra.mxu0 %v936
        %1037 = vmatpush.msra.mxu0 %v934
        %1038 = vmatpush.msra.mxu0 %v932
        %1039 = vmatpush.msra.mxu0 %v930
        %1040 = vmatpush.msra.mxu0 %v928
        %1041 = vmatpush.msra.mxu0 %v926
        %1042 = vmatpush.msra.mxu0 %v924
        %1043 = vmatpush.msra.mxu0 %v922
        %1044 = vmatpush.msra.mxu0 %v920
        %1045 = vmatpush.msra.mxu0 %v918
        %1046 = vmatpush.msra.mxu0 %v916
        %1047 = vmatpush.msra.mxu0 %v914
        %1048 = vmatpush.msra.mxu0 %v912
        %1049 = vmatmul.f32.gmra.mxu0 %v657
        %v1050 = vpop.f32.mrf.mxu0
        %v1051 = vadd.f32 0.0, %v1050
        %1052 = vmatmul.f32.gmra.mxu0 %v659
        %v1053 = vpop.f32.mrf.mxu0
        %v1054 = vadd.f32 0.0, %v1053
        %1055 = vmatmul.f32.gmra.mxu0 %v661
        %v1056 = vpop.f32.mrf.mxu0
        %v1057 = vadd.f32 0.0, %v1056
        %1058 = vmatmul.f32.gmra.mxu0 %v663
        %v1059 = vpop.f32.mrf.mxu0
        %v1060 = vadd.f32 0.0, %v1059
        %1061 = vdwg.mxu0
        %1062 = vmatpush.msra.mxu0 %v974
        %1063 = vmatpush.msra.mxu0 %v972
        %1064 = vmatpush.msra.mxu0 %v970
        %1065 = vmatpush.msra.mxu0 %v968
        %1066 = vmatpush.msra.mxu0 %v966
        %1067 = vmatpush.msra.mxu0 %v964
        %1068 = vmatpush.msra.mxu0 %v962
        %1069 = vmatpush.msra.mxu0 %v960
        %1070 = vmatpush.msra.mxu0 %v958
        %1071 = vmatpush.msra.mxu0 %v956
        %1072 = vmatpush.msra.mxu0 %v954
        %1073 = vmatpush.msra.mxu0 %v952
        %1074 = vmatpush.msra.mxu0 %v950
        %1075 = vmatpush.msra.mxu0 %v948
        %1076 = vmatpush.msra.mxu0 %v946
        %1077 = vmatpush.msra.mxu0 %v944
        %1078 = vmatmul.f32.gmra.mxu0 %v658
        %v1079 = vpop.f32.mrf.mxu0
        %v1080 = vadd.f32 %v1051, %v1079
        %1081 = vmatmul.f32.gmra.mxu0 %v660
        %v1082 = vpop.f32.mrf.mxu0
        %v1083 = vadd.f32 %v1054, %v1082
        %1084 = vmatmul.f32.gmra.mxu0 %v662
        %v1085 = vpop.f32.mrf.mxu0
        %v1086 = vadd.f32 %v1057, %v1085
        %1087 = vmatmul.f32.gmra.mxu0 %v664
        %v1088 = vpop.f32.mrf.mxu0
        %v1089 = vadd.f32 %v1060, %v1088
        %1090 = vdwg.mxu0
        %v1099 = vrot.slane %v776, 7
        %v1100 = vrot.slane %v834, 7
        %v1101 = vrot.slane %v779, 7
        %v1102 = vsel %vm519, %v1099, %v1101
        %v1103 = vrot.slane %v837, 7
        %v1104 = vsel %vm519, %v1100, %v1103
        %v1105 = vrot.slane %v782, 7
        %v1106 = vsel %vm519, %v1101, %v1105
        %v1107 = vrot.slane %v840, 7
        %v1108 = vsel %vm519, %v1103, %v1107
        %v1109 = vrot.slane %v785, 7
        %v1110 = vsel %vm519, %v1105, %v1109
        %v1111 = vrot.slane %v843, 7
        %v1112 = vsel %vm519, %v1107, %v1111
        %v1121 = vsel %vm519, 0.0, %v1099
        %v1122 = vsel %vm519, 0.0, %v1100
        %1123 = vmatpush.msra.mxu0 %v876
        %1124 = vmatpush.msra.mxu0 %v874
        %1125 = vmatpush.msra.mxu0 %v872
        %1126 = vmatpush.msra.mxu0 %v870
        %1127 = vmatpush.msra.mxu0 %v868
        %1128 = vmatpush.msra.mxu0 %v866
        %1129 = vmatpush.msra.mxu0 %v864
        %1130 = vmatpush.msra.mxu0 %v862
        %1131 = vmatpush.msra.mxu0 %v860
        %1132 = vmatpush.msra.mxu0 %v858
        %1133 = vmatpush.msra.mxu0 %v856
        %1134 = vmatpush.msra.mxu0 %v854
        %1135 = vmatpush.msra.mxu0 %v852
        %1136 = vmatpush.msra.mxu0 %v850
        %1137 = vmatpush.msra.mxu0 %v848
        %1138 = vmatpush.msra.mxu0 %v846
        %1139 = vmatmul.f32.gmra.mxu0 %v657
        %v1140 = vpop.f32.mrf.mxu0
        %v1141 = vadd.f32 %v1121, %v1140
        %1142 = vmatmul.f32.gmra.mxu0 %v659
        %v1143 = vpop.f32.mrf.mxu0
        %v1144 = vadd.f32 %v1102, %v1143
        %1145 = vmatmul.f32.gmra.mxu0 %v661
        %v1146 = vpop.f32.mrf.mxu0
        %v1147 = vadd.f32 %v1106, %v1146
        %1148 = vmatmul.f32.gmra.mxu0 %v663
        %v1149 = vpop.f32.mrf.mxu0
        %v1150 = vadd.f32 %v1110, %v1149
        %1151 = vdwg.mxu0
        %1152 = vmatpush.msra.mxu0 %v908
        %1153 = vmatpush.msra.mxu0 %v906
        %1154 = vmatpush.msra.mxu0 %v904
        %1155 = vmatpush.msra.mxu0 %v902
        %1156 = vmatpush.msra.mxu0 %v900
        %1157 = vmatpush.msra.mxu0 %v898
        %1158 = vmatpush.msra.mxu0 %v896
        %1159 = vmatpush.msra.mxu0 %v894
        %1160 = vmatpush.msra.mxu0 %v892
        %1161 = vmatpush.msra.mxu0 %v890
        %1162 = vmatpush.msra.mxu0 %v888
        %1163 = vmatpush.msra.mxu0 %v886
        %1164 = vmatpush.msra.mxu0 %v884
        %1165 = vmatpush.msra.mxu0 %v882
        %1166 = vmatpush.msra.mxu0 %v880
        %1167 = vmatpush.msra.mxu0 %v878
        %1168 = vmatmul.f32.gmra.mxu0 %v658
        %v1169 = vpop.f32.mrf.mxu0
        %v1170 = vadd.f32 %v1141, %v1169
        %1171 = vmatmul.f32.gmra.mxu0 %v660
        %v1172 = vpop.f32.mrf.mxu0
        %v1173 = vadd.f32 %v1144, %v1172
        %1174 = vmatmul.f32.gmra.mxu0 %v662
        %v1175 = vpop.f32.mrf.mxu0
        %v1176 = vadd.f32 %v1147, %v1175
        %1177 = vmatmul.f32.gmra.mxu0 %v664
        %v1178 = vpop.f32.mrf.mxu0
        %v1179 = vadd.f32 %v1150, %v1178
        %1180 = vdwg.mxu0
        %1181 = vmatpush.msra.mxu0 %v877
        %1182 = vmatpush.msra.mxu0 %v875
        %1183 = vmatpush.msra.mxu0 %v873
        %1184 = vmatpush.msra.mxu0 %v871
        %1185 = vmatpush.msra.mxu0 %v869
        %1186 = vmatpush.msra.mxu0 %v867
        %1187 = vmatpush.msra.mxu0 %v865
        %1188 = vmatpush.msra.mxu0 %v863
        %1189 = vmatpush.msra.mxu0 %v861
        %1190 = vmatpush.msra.mxu0 %v859
        %1191 = vmatpush.msra.mxu0 %v857
        %1192 = vmatpush.msra.mxu0 %v855
        %1193 = vmatpush.msra.mxu0 %v853
        %1194 = vmatpush.msra.mxu0 %v851
        %1195 = vmatpush.msra.mxu0 %v849
        %1196 = vmatpush.msra.mxu0 %v847
        %1197 = vmatmul.f32.gmra.mxu0 %v657
        %v1198 = vpop.f32.mrf.mxu0
        %v1199 = vadd.f32 %v1122, %v1198
        %1200 = vmatmul.f32.gmra.mxu0 %v659
        %v1201 = vpop.f32.mrf.mxu0
        %v1202 = vadd.f32 %v1104, %v1201
        %1203 = vmatmul.f32.gmra.mxu0 %v661
        %v1204 = vpop.f32.mrf.mxu0
        %v1205 = vadd.f32 %v1108, %v1204
        %1206 = vmatmul.f32.gmra.mxu0 %v663
        %v1207 = vpop.f32.mrf.mxu0
        %v1208 = vadd.f32 %v1112, %v1207
        %1209 = vdwg.mxu0
        %1210 = vmatpush.msra.mxu0 %v909
        %1211 = vmatpush.msra.mxu0 %v907
        %1212 = vmatpush.msra.mxu0 %v905
        %1213 = vmatpush.msra.mxu0 %v903
        %1214 = vmatpush.msra.mxu0 %v901
        %1215 = vmatpush.msra.mxu0 %v899
        %1216 = vmatpush.msra.mxu0 %v897
        %1217 = vmatpush.msra.mxu0 %v895
        %1218 = vmatpush.msra.mxu0 %v893
        %1219 = vmatpush.msra.mxu0 %v891
        %1220 = vmatpush.msra.mxu0 %v889
        %1221 = vmatpush.msra.mxu0 %v887
        %1222 = vmatpush.msra.mxu0 %v885
        %1223 = vmatpush.msra.mxu0 %v883
        %1224 = vmatpush.msra.mxu0 %v881
        %1225 = vmatpush.msra.mxu0 %v879
        %1226 = vmatmul.f32.gmra.mxu0 %v658
        %v1227 = vpop.f32.mrf.mxu0
        %v1228 = vadd.f32 %v1199, %v1227
        %1229 = vmatmul.f32.gmra.mxu0 %v660
        %v1230 = vpop.f32.mrf.mxu0
        %v1231 = vadd.f32 %v1202, %v1230
        %1232 = vmatmul.f32.gmra.mxu0 %v662
        %v1233 = vpop.f32.mrf.mxu0
        %v1234 = vadd.f32 %v1205, %v1233
        %1235 = vmatmul.f32.gmra.mxu0 %v664
        %v1236 = vpop.f32.mrf.mxu0
        %v1237 = vadd.f32 %v1208, %v1236
        %1238 = vdwg.mxu0
        %v1247 = vrot.slane %v1022, 1
        %v1248 = vrot.slane %v1025, 1
        %v1249 = vsel %vm610, %v1247, %v1248
        %v1250 = vrot.slane %v1080, 1
        %v1251 = vrot.slane %v1083, 1
        %v1252 = vsel %vm610, %v1250, %v1251
        %v1253 = vrot.slane %v1028, 1
        %v1254 = vsel %vm610, %v1248, %v1253
        %v1255 = vrot.slane %v1086, 1
        %v1256 = vsel %vm610, %v1251, %v1255
        %v1257 = vrot.slane %v1031, 1
        %v1258 = vsel %vm610, %v1253, %v1257
        %v1259 = vrot.slane %v1089, 1
        %v1260 = vsel %vm610, %v1255, %v1259
        %v1269 = vsel %vm610, %v1257, 0.0
        %v1270 = vsel %vm610, %v1259, 0.0
        %v1271 = vadd.f32 %v1170, %v1249
        %v1272 = vadd.f32 %v1228, %v1252
        %v1273 = vadd.f32 %v1173, %v1254
        %v1274 = vadd.f32 %v1231, %v1256
        %v1275 = vadd.f32 %v1176, %v1258
        %v1276 = vadd.f32 %v1234, %v1260
        %v1277 = vadd.f32 %v1179, %v1269
        %v1278 = vadd.f32 %v1237, %v1270
        %v1279 = vld [vmem:[%s5] sm:$0x3]
        %v1281 = vperm.slane %v1279, 0
        %v1282 = vperm.slane %v1279, 1
        %v1285 = vadd.f32 %v1271, %v1281
        %v1286 = vadd.f32 %v1272, %v1282
        %v1287 = vadd.f32 %v1273, %v1281
        %v1288 = vadd.f32 %v1274, %v1282
        %v1289 = vadd.f32 %v1275, %v1281
        %v1290 = vadd.f32 %v1276, %v1282
        %v1291 = vadd.f32 %v1277, %v1281
        %v1292 = vadd.f32 %v1278, %v1282
        %v1293 = vmax.f32 %v1285, 0.0
        %v1294 = vmax.f32 %v1286, 0.0
        %v1295 = vmax.f32 %v1287, 0.0
        %v1296 = vmax.f32 %v1288, 0.0
        %v1297 = vmax.f32 %v1289, 0.0
        %v1298 = vmax.f32 %v1290, 0.0
        %v1299 = vmax.f32 %v1291, 0.0
        %v1300 = vmax.f32 %v1292, 0.0
        %1301 = vst [vmem:[%s278] sm:$0xff] %v1293
        %1302 = vst [vmem:[%s278 + $0x8] sm:$0xff] %v1294
        %1303 = vst [vmem:[%s278 + $0x10] sm:$0xff] %v1295
        %1304 = vst [vmem:[%s278 + $0x18] sm:$0xff] %v1296
        %1305 = vst [vmem:[%s278 + $0x20] sm:$0xff] %v1297
        %1306 = vst [vmem:[%s278 + $0x28] sm:$0xff] %v1298
        %1307 = vst [vmem:[%s278 + $0x30] sm:$0xff] %v1299
        %1308 = vst [vmem:[%s278 + $0x38] sm:$0xff] %v1300
        %s1309 = sand.u32 %s161, 1
        %s1310 = scalar_lea.sflag [#allocation4], %s1309
        %s1311 = sand.u32 %s161, 1
        %s1312 = smul.addr %s1311, 64
        %s1313 = scalar_lea.vmem [#allocation7], %s1312
        // Predicated region
        $region53: #{tpu_custom_call.1} parent=43 // pred_check
          %p1314 = pneg %p171
        $region54: #{tpu_custom_call.1} parent=43 // pred_check_branch
          %1316 = sbr.rel (%p1314) target = $region56
        $region55: #{tpu_custom_call.1} parent=43 // pred_region
          %1318 = vsyncadd %s1310, 0
          %s1319 = smul.addr %s22, 8
          %s1320 = smul.addr %s1319, 8
          %s1321 = scalar_lea.hbm %s6, %s1320
          %s1322 = sshll.u32 %s1313, 4
          %s1323 = int_to_ptr.vmem [resolvable:$true] %s1322
          %s1324 = sshll.u32 %s1321, 4
          %s1325 = int_to_ptr.hbm [resolvable:$true] %s1324
          %1330 = dma.vmem_to_hbm [thread:$0]  %s1323, 1024, %s1325, %s1310, 256, 256, 16
        $region56: #{tpu_custom_call.1} parent=43 // pred_fallthru
          _
      $region44: #{tpu_custom_call.1} parent=5 // pred_fallthru
        _
      %p1331 = scmp.le.s32.totalorder 2, %s17
      // Predicated region
      $region57: #{tpu_custom_call.1} parent=5 // pred_check
        %p1332 = pneg %p1331
      $region58: #{tpu_custom_call.1} parent=5 // pred_check_branch
        %1334 = sbr.rel (%p1332) target = $region60
      $region59: #{tpu_custom_call.1} parent=5 // pred_region
        %s1335 = ssub.s32 %s17, 2
        // Predicated region
        $region61: #{tpu_custom_call.1} parent=59 // pred_check
          %p1336 = pneg %p177
        $region62: #{tpu_custom_call.1} parent=59 // pred_check_branch
          %1338 = sbr.rel (%p1336) target = $region64
        $region63: #{tpu_custom_call.1} parent=59 // pred_region
          %s1339 = sand.u32 %s162, 1
          %s1340 = scalar_lea.sflag [#allocation4], %s1339
          %s1341 = sand.u32 %s162, 1
          %s1342 = smul.addr %s1341, 64
          %s1343 = scalar_lea.vmem [#allocation7], %s1342
          %1345 = dma.done %s1340, 1024
        $region64: #{tpu_custom_call.1} parent=59 // pred_fallthru
          _
      $region60: #{tpu_custom_call.1} parent=5 // pred_fallthru
        _
    $region6: #{tpu_custom_call.1} parent=1 // loop_footer
      %s21 = sadd.s32 1, %s17
    $region7: #{tpu_custom_call.1} parent=1 // loop_footer_branch
      %16 = sbr.rel target = $region3
    $region8: #{tpu_custom_call.1} parent=1 // loop_exit
      _
    %1346 = vsyncpa [#allocation3], 1
    %s1347 = scalar_lea.sflag [#allocation3], 1
    %1348 = vsyncpa %s1347, 1
    %1349 = vsyncpa [#allocation6], 1
    %1350 = vsyncpa [#allocation4], 1
    %s1351 = scalar_lea.sflag [#allocation4], 1
    %1352 = vsyncpa %s1351, 1

</llo_original>
